<compile_context>
chip_gen: v7x
topology: tpu7x:2x2x1
jax: 0.10.0
libtpu: 0.0.40
codegen_flags: <defaults>
</compile_context>

<pallas_src>
import functools

import jax
import jax.numpy as jnp
from jax import lax
from jax.experimental import pallas as pl
from jax.experimental.pallas import tpu as pltpu

EPS = 1e-5                      # nn.BatchNorm2d default eps
VMEM_LIMIT = 32 * 1024 * 1024   # explicit scoped-VMEM cap (safe on v5e/v6e/v7x)


# ---------------- Pallas kernels ----------------

def _conv_rows_kernel(*refs, fuse_bn, mm_dtype, img_h):
    """[optional BN+ReLU prologue] + 3x3 conv + bias + ReLU + BN partial stats.

    Activations are stacked-row matrices (nb*H, W*Cin).  The convolution is
        out[h] = relu( sum_kh  x[h + kh - 1] @ B[kh]  + bias )
    where B[kh] is a width-banded (W*Cin, W*Cout) matrix (width zero-padding is
    encoded in the band).  Height shifts are sublane rolls masked at image
    boundaries (row % H), so multiple images can share one block.
    """
    if fuse_bn:
        x_ref, sc_ref, sh_ref, b_ref, bias_ref, out_ref, sum_ref, sq_ref = refs
        a = jnp.maximum(x_ref[...].astype(jnp.float32) * sc_ref[...] + sh_ref[...], 0.0)
    else:
        x_ref, b_ref, bias_ref, out_ref, sum_ref, sq_ref = refs
        a = x_ref[...].astype(jnp.float32)

    rows = a.shape[0]
    r = lax.broadcasted_iota(jnp.int32, (rows, 1), 0) % img_h   # row index within image
    # a[h-1] / a[h+1] with zero fill at each image's border (the conv's height
    # zero-padding of the *post-prologue* activation).
    a_prev = jnp.where(r >= 1, pltpu.roll(a, shift=1, axis=0), 0.0)
    a_next = jnp.where(r <= img_h - 2, pltpu.roll(a, shift=rows - 1, axis=0), 0.0)

    acc = jnp.dot(a_prev.astype(mm_dtype), b_ref[0], preferred_element_type=jnp.float32)
    acc = acc + jnp.dot(a.astype(mm_dtype), b_ref[1], preferred_element_type=jnp.float32)
    acc = acc + jnp.dot(a_next.astype(mm_dtype), b_ref[2], preferred_element_type=jnp.float32)

    h = jnp.maximum(acc + bias_ref[...], 0.0)          # conv + bias + ReLU, (rows, W*Cout)
    out_ref[...] = h.astype(out_ref.dtype)             # bf16 storage on the perf path
    # per-(w, c) partial sums (f32, pre-downcast) for the *following* BatchNorm
    sum_ref[0] = jnp.sum(h, axis=0, keepdims=True)
    sq_ref[0] = jnp.sum(h * h, axis=0, keepdims=True)


def _bn_relu_pool_kernel(x_ref, sc_ref, sh_ref, se_ref, so_ref, re_ref, ro_ref,
                         y_ref, p_ref):
    """bn2-apply + ReLU with dual output: y and its 2x2/2 maxpool.

    The pool uses exact 0/1 selection matmuls (lane compaction on the MXU) so
    both outputs stay lane-dense: no strided stores, no lane-dim reshapes.
    Pool matmuls stay f32 so `pooled` is the exact max of the stored `y`.
    """
    y = jnp.maximum(x_ref[...].astype(jnp.float32) * sc_ref[...] + sh_ref[...], 0.0)
    y_ref[...] = y
    hmax = jnp.maximum(                                              # horizontal 2-max
        jnp.dot(y, se_ref[...], preferred_element_type=jnp.float32),
        jnp.dot(y, so_ref[...], preferred_element_type=jnp.float32))
    p_ref[...] = jnp.maximum(                                        # vertical 2-max
        jnp.dot(re_ref[...], hmax, preferred_element_type=jnp.float32),
        jnp.dot(ro_ref[...], hmax, preferred_element_type=jnp.float32))


# ---------------- wrappers ----------------

def _pick_nb(N, H, row_bytes):
    """Largest divisor `nb` of N such that nb images fit one VMEM block and the
    (8,128) sublane tiling constraint stays valid when the grid has >1 step."""
    budget = 6 * 1024 * 1024          # per activation buffer; Pallas double-buffers
    best = None
    for cand in range(1, N + 1):
        if N % cand:
            continue
        if cand != N and (cand * H) % 16 != 0:   # keeps y AND pooled blocks 8-aligned
            continue
        if cand * H * row_bytes > budget:
            continue
        best = cand
    # Fallback: whole batch in one block (full-extent blocks -> no tiling constraint).
    return best if best is not None else N


def _band_weights(w_oihw, W, dtype):
    """(Cout, Cin, 3, 3) conv weight -> B[kh] of shape (W*Cin, W*Cout) such that
    conv(x)[h] = sum_kh x_rows[h+kh-1] @ B[kh]  (width zero-padding in the band)."""
    Cout, Cin, KH, KW = w_oihw.shape
    wt = jnp.transpose(w_oihw, (2, 3, 1, 0))                     # (KH, KW, Cin, Cout)
    w_in = jnp.arange(W)[:, None]
    w_out = jnp.arange(W)[None, :]
    kw = w_in - w_out + KW // 2                                  # (W, W)
    valid = (kw >= 0) & (kw < KW)
    T = wt[:, jnp.clip(kw, 0, KW - 1), :, :]                     # (KH, Win, Wout, Cin, Cout)
    T = T * valid[None, :, :, None, None].astype(wt.dtype)
    T = jnp.transpose(T, (0, 1, 3, 2, 4))                        # (KH, Win, Cin, Wout, Cout)
    return T.reshape(KH, W * Cin, W * Cout).astype(dtype)


def _conv_call(x_rows, B, bias_row, nb, H, store_dtype, scale_row=None, shift_row=None):
    """One fused conv pallas_call (optionally with BN+ReLU prologue).

    x_rows: (N*H, W*Cin) stacked-row activations. Grid over groups of nb images.
    """
    NH, WCi = x_rows.shape
    KH, _, WCo = B.shape
    rows = nb * H
    G = NH // rows
    fuse_bn = scale_row is not None

    inputs = [x_rows]
    in_specs = [pl.BlockSpec((rows, WCi), lambda n: (n, 0))]
    if fuse_bn:
        inputs += [scale_row, shift_row]
        in_specs += [pl.BlockSpec((1, WCi), lambda n: (0, 0)),
                     pl.BlockSpec((1, WCi), lambda n: (0, 0))]
    inputs += [B, bias_row]
    in_specs += [pl.BlockSpec((KH, WCi, WCo), lambda n: (0, 0, 0)),
                 pl.BlockSpec((1, WCo), lambda n: (0, 0))]

    out, s, sq = pl.pallas_call(
        functools.partial(_conv_rows_kernel, fuse_bn=fuse_bn, mm_dtype=B.dtype, img_h=H),
        grid=(G,),
        in_specs=in_specs,
        out_specs=[pl.BlockSpec((rows, WCo), lambda n: (n, 0)),
                   pl.BlockSpec((1, 1, WCo), lambda n: (n, 0, 0)),
                   pl.BlockSpec((1, 1, WCo), lambda n: (n, 0, 0))],
        out_shape=(jax.ShapeDtypeStruct((NH, WCo), store_dtype),
                   jax.ShapeDtypeStruct((G, 1, WCo), jnp.float32),
                   jax.ShapeDtypeStruct((G, 1, WCo), jnp.float32)),
        compiler_params=pltpu.CompilerParams(
            dimension_semantics=("parallel",),   # batch-group grid -> megacore on v7x
            vmem_limit_bytes=VMEM_LIMIT),
    )(*inputs)
    return out, s, sq


def _bn_scale_shift_rows(sum_g, sq_g, gamma, beta, count, W):
    """Fold per-(w,c) partial sums into per-channel BN scale/shift, tiled to (1, W*C)."""
    C = gamma.shape[0]
    s = jnp.sum(sum_g, axis=(0, 1)).reshape(W, C).sum(axis=0)
    sq = jnp.sum(sq_g, axis=(0, 1)).reshape(W, C).sum(axis=0)
    mean = s / count
    # E[x^2] - mean^2 can go slightly negative in f32 (cancellation): clamp before rsqrt.
    var = jnp.maximum(sq / count - mean * mean, 0.0)
    scale = gamma / jnp.sqrt(var + EPS)
    shift = beta - mean * scale
    return (jnp.tile(scale, W).reshape(1, W * C),
            jnp.tile(shift, W).reshape(1, W * C))


def _pool_selectors(H, W, C):
    """Exact 0/1 selection matrices implementing 2x2/2 maxpool in the (H, W*C) layout."""
    re = (jnp.arange(H)[None, :] == 2 * jnp.arange(H // 2)[:, None]).astype(jnp.float32)
    ro = (jnp.arange(H)[None, :] == 2 * jnp.arange(H // 2)[:, None] + 1).astype(jnp.float32)
    pe = (jnp.arange(W)[:, None] == 2 * jnp.arange(W // 2)[None, :]).astype(jnp.float32)
    po = (jnp.arange(W)[:, None] == 2 * jnp.arange(W // 2)[None, :] + 1).astype(jnp.float32)
    eye_c = jnp.eye(C, dtype=jnp.float32)
    return jnp.kron(pe, eye_c), jnp.kron(po, eye_c), re, ro      # Se, So, Re, Ro


def _bn_relu_pool_call(h, scale_row, shift_row, W, C, nb, H):
    NH, WC = h.shape
    rows = nb * H
    rows_h = rows // 2
    G = NH // rows
    WCh = WC // 2
    Se, So, Re1, Ro1 = _pool_selectors(H, W, C)
    eye_nb = jnp.eye(nb, dtype=jnp.float32)
    Re = jnp.kron(eye_nb, Re1)                                   # block-diag per image
    Ro = jnp.kron(eye_nb, Ro1)

    y, pooled = pl.pallas_call(
        _bn_relu_pool_kernel,
        grid=(G,),
        in_specs=[pl.BlockSpec((rows, WC), lambda n: (n, 0)),
                  pl.BlockSpec((1, WC), lambda n: (0, 0)),
                  pl.BlockSpec((1, WC), lambda n: (0, 0)),
                  pl.BlockSpec((WC, WCh), lambda n: (0, 0)),
                  pl.BlockSpec((WC, WCh), lambda n: (0, 0)),
                  pl.BlockSpec((rows_h, rows), lambda n: (0, 0)),
                  pl.BlockSpec((rows_h, rows), lambda n: (0, 0))],
        out_specs=[pl.BlockSpec((rows, WC), lambda n: (n, 0)),
                   pl.BlockSpec((rows_h, WCh), lambda n: (n, 0))],
        out_shape=(jax.ShapeDtypeStruct((NH, WC), jnp.float32),
                   jax.ShapeDtypeStruct((NH // 2, WCh), jnp.float32)),
        compiler_params=pltpu.CompilerParams(
            dimension_semantics=("parallel",),
            vmem_limit_bytes=VMEM_LIMIT),
    )(h, scale_row, shift_row, Se, So, Re, Ro)
    return y, pooled


def reduction_block_forward(x_nchw, p, mxu_dtype=jnp.bfloat16):
    """Returns (maxpooled, pre-pool) feature maps, both NCHW, matching PyTorch."""
    N, Cin, H, W = x_nchw.shape
    C1 = p["w1"].shape[0]
    C2 = p["w2"].shape[0]
    assert H % 2 == 0 and W % 2 == 0, "2x2/2 maxpool expects even spatial dims"

    # Intermediates h1/h2 round-trip HBM in the MXU dtype (bf16 perf path, f32 strict path).
    store_dtype = mxu_dtype

    # NCHW -> lane-dense stacked-row layout (N*H, W*C)  (interface glue only).
    x_rows = jnp.transpose(x_nchw, (0, 2, 3, 1)).astype(jnp.float32).reshape(N * H, W * Cin)

    # Images per grid step (bigger tiles -> amortized per-step overhead, larger MXU M).
    nb = _pick_nb(N, H, W * max(Cin, C1, C2) * 4 * 3)

    # --- call 1: conv1 + bias + ReLU (+ bn1 partial stats) ---
    B1 = _band_weights(p["w1"], W, mxu_dtype)
    bias1 = jnp.tile(p["b1"].astype(jnp.float32), W).reshape(1, W * C1)
    h1, s1, q1 = _conv_call(x_rows, B1, bias1, nb, H, store_dtype)

    # --- call 2: bn1-apply + ReLU + conv2 + bias + ReLU (+ bn2 partial stats) ---
    scale1, shift1 = _bn_scale_shift_rows(s1, q1, p["gamma1"], p["beta1"], N * H * W, W)
    B2 = _band_weights(p["w2"], W, mxu_dtype)
    bias2 = jnp.tile(p["b2"].astype(jnp.float32), W).reshape(1, W * C2)
    h2, s2, q2 = _conv_call(h1, B2, bias2, nb, H, store_dtype, scale1, shift1)

    # --- call 3: bn2-apply + ReLU + 2x2 maxpool (dual output) ---
    scale2, shift2 = _bn_scale_shift_rows(s2, q2, p["gamma2"], p["beta2"], N * H * W, W)
    y_rows, p_rows = _bn_relu_pool_call(h2, scale2, shift2, W, C2, nb, H)

    y = jnp.transpose(y_rows.reshape(N, H, W, C2), (0, 3, 1, 2))
    pooled = jnp.transpose(p_rows.reshape(N, H // 2, W // 2, C2), (0, 3, 1, 2))
    return pooled, y


# ---------------- pure-JAX reference (for correctness check) ----------------

def _ref_forward(x_nchw, p):
    def conv_relu_ref(x, w, b):
        y = lax.conv_general_dilated(x, w, (1, 1), ((1, 1), (1, 1)),
                                     dimension_numbers=("NCHW", "OIHW", "NCHW"))
        return jnp.maximum(y + b[None, :, None, None], 0.0)

    def bn_relu_ref(x, g, bt):
        mean = x.mean(axis=(0, 2, 3), keepdims=True)
        var = ((x - mean) ** 2).mean(axis=(0, 2, 3), keepdims=True)
        xn = (x - mean) / jnp.sqrt(var + EPS)
        return jnp.maximum(xn * g[None, :, None, None] + bt[None, :, None, None], 0.0)

    x = conv_relu_ref(x_nchw, p["w1"], p["b1"])
    x = bn_relu_ref(x, p["gamma1"], p["beta1"])
    x = conv_relu_ref(x, p["w2"], p["b2"])
    y = bn_relu_ref(x, p["gamma2"], p["beta2"])
    N, C, H, W = y.shape
    pooled = y.reshape(N, C, H // 2, 2, W // 2, 2).max(axis=(3, 5))
    return pooled, y


if __name__ == "__main__":
    N, Cin, H, W = 2, 4, 16, 16
    l1_channels, out_channels = 8, 16

    key = jax.random.PRNGKey(0)
    ks = jax.random.split(key, 9)
    params = {
        "w1": 0.2 * jax.random.normal(ks[0], (l1_channels, Cin, 3, 3), jnp.float32),
        "b1": 0.1 * jax.random.normal(ks[1], (l1_channels,), jnp.float32),
        "gamma1": 1.0 + 0.1 * jax.random.normal(ks[2], (l1_channels,), jnp.float32),
        "beta1": 0.1 * jax.random.normal(ks[3], (l1_channels,), jnp.float32),
        "w2": 0.2 * jax.random.normal(ks[4], (out_channels, l1_channels, 3, 3), jnp.float32),
        "b2": 0.1 * jax.random.normal(ks[5], (out_channels,), jnp.float32),
        "gamma2": 1.0 + 0.1 * jax.random.normal(ks[6], (out_channels,), jnp.float32),
        "beta2": 0.1 * jax.random.normal(ks[7], (out_channels,), jnp.float32),
    }
    x = jax.random.normal(ks[8], (N, Cin, H, W), jnp.float32)

    fwd_bf16 = jax.jit(functools.partial(reduction_block_forward, mxu_dtype=jnp.bfloat16))
    fwd_f32 = jax.jit(functools.partial(reduction_block_forward, mxu_dtype=jnp.float32))

    pooled, y = jax.block_until_ready(fwd_bf16(x, params))
    ref_pooled, ref_y = _ref_forward(x, params)

    assert pooled.shape == (N, out_channels, H // 2, W // 2)
    assert y.shape == (N, out_channels, H // 2 * 2, W // 2 * 2)
    # bf16 perf path: bf16 MXU operands + bf16 intermediate storage compound over two
    # 3x3 convs -> loose gate here; the strict numerical check is the f32 path below.
    assert jnp.allclose(pooled, ref_pooled, atol=8e-2, rtol=8e-2)
    assert jnp.allclose(y, ref_y, atol=8e-2, rtol=8e-2)

    # f32 MXU/storage path: tight check that the fused kernels implement the exact math.
    pooled32, y32 = jax.block_until_ready(fwd_f32(x, params))
    assert jnp.allclose(pooled32, ref_pooled, atol=2e-3, rtol=2e-3)
    assert jnp.allclose(y32, ref_y, atol=2e-3, rtol=2e-3)

    print("KERNEL_OK")
</pallas_src>

<mosaic_0001>
module attributes {stable_mosaic.version = 11 : i64} {
  func.func @_conv_rows_kernel(%arg0: i32, %arg1: memref<32x64xf32, #tpu.memory_space<vmem>>, %arg2: memref<3x64x128xbf16, #tpu.memory_space<vmem>>, %arg3: memref<1x128xf32, #tpu.memory_space<vmem>>, %arg4: memref<32x128xbf16, #tpu.memory_space<vmem>>, %arg5: memref<1x1x128xf32, #tpu.memory_space<vmem>>, %arg6: memref<1x1x128xf32, #tpu.memory_space<vmem>>) attributes {dimension_semantics = [#tpu.dimension_semantics<parallel>], iteration_bounds = array<i64: 1>, scalar_prefetch = 0 : i64, scratch_operands = 0 : i64, tpu.core_type = #tpu.core_type<tc>, window_params = [{transform_indices = @transform_0, window_bounds = array<i64: 32, 64>}, {pipeline_mode = #tpu.pipeline_mode<synchronous>, transform_indices = @transform_1, window_bounds = array<i64: 3, 64, 128>}, {pipeline_mode = #tpu.pipeline_mode<synchronous>, transform_indices = @transform_2, window_bounds = array<i64: 1, 128>}, {transform_indices = @transform_3, window_bounds = array<i64: 32, 128>}, {transform_indices = @transform_4, window_bounds = array<i64: 1, 1, 128>}, {transform_indices = @transform_5, window_bounds = array<i64: 1, 1, 128>}]} {
    %c0 = arith.constant 0 : index
    %c0_0 = arith.constant 0 : index
    %0 = vector.load %arg1[%c0, %c0_0] : memref<32x64xf32, #tpu.memory_space<vmem>>, vector<32x64xf32>
    %1 = tpu.iota {dimensions = array<i32: 0>} : vector<32x1xi32>
    %c16_i32 = arith.constant 16 : i32
    %c0_i32 = arith.constant 0 : i32
    %2 = arith.cmpi eq, %c16_i32, %c0_i32 : i32
    %c1_i32 = arith.constant 1 : i32
    %3 = arith.select %2, %c1_i32, %c16_i32 : i32
    %4 = vector.broadcast %3 : i32 to vector<32x1xi32>
    %5 = arith.remsi %1, %4 : vector<32x1xi32>
    %c0_i32_1 = arith.constant 0 : i32
    %6 = vector.broadcast %c0_i32_1 : i32 to vector<32x1xi32>
    %7 = arith.cmpi ne, %5, %6 : vector<32x1xi32>
    %c0_i32_2 = arith.constant 0 : i32
    %8 = vector.broadcast %c0_i32_2 : i32 to vector<32x1xi32>
    %9 = arith.cmpi slt, %5, %8 : vector<32x1xi32>
    %c0_i32_3 = arith.constant 0 : i32
    %10 = arith.cmpi slt, %3, %c0_i32_3 : i32
    %11 = vector.broadcast %10 : i1 to vector<32x1xi1>
    %12 = vector.broadcast %11 : vector<32x1xi1> to vector<32x1xi1>
    %13 = arith.xori %9, %12 : vector<32x1xi1>
    %14 = arith.andi %13, %7 : vector<32x1xi1>
    %15 = vector.broadcast %3 : i32 to vector<32x1xi32>
    %16 = arith.addi %5, %15 : vector<32x1xi32>
    %17 = arith.select %14, %16, %5 : vector<32x1xi1>, vector<32x1xi32>
    %c1_i32_4 = arith.constant 1 : i32
    %18 = vector.broadcast %c1_i32_4 : i32 to vector<32x1xi32>
    %19 = arith.cmpi sge, %17, %18 : vector<32x1xi32>
    %c1_i32_5 = arith.constant 1 : i32
    %20 = tpu.dynamic_rotate %0 by %c1_i32_5 dim 0 : vector<32x64xf32>, i32 -> vector<32x64xf32>
    %cst = arith.constant 0.000000e+00 : f32
    %21 = vector.shape_cast %19 : vector<32x1xi1> to vector<32x1xi1>
    %22 = vector.broadcast %21 : vector<32x1xi1> to vector<32x64xi1>
    %23 = vector.broadcast %cst : f32 to vector<32x64xf32>
    %24 = arith.select %22, %20, %23 : vector<32x64xi1>, vector<32x64xf32>
    %c14_i32 = arith.constant 14 : i32
    %25 = vector.broadcast %c14_i32 : i32 to vector<32x1xi32>
    %26 = arith.cmpi sle, %17, %25 : vector<32x1xi32>
    %c31_i32 = arith.constant 31 : i32
    %27 = tpu.dynamic_rotate %0 by %c31_i32 dim 0 : vector<32x64xf32>, i32 -> vector<32x64xf32>
    %cst_6 = arith.constant 0.000000e+00 : f32
    %28 = vector.shape_cast %26 : vector<32x1xi1> to vector<32x1xi1>
    %29 = vector.broadcast %28 : vector<32x1xi1> to vector<32x64xi1>
    %30 = vector.broadcast %cst_6 : f32 to vector<32x64xf32>
    %31 = arith.select %29, %27, %30 : vector<32x64xi1>, vector<32x64xf32>
    %32 = arith.truncf %24 : vector<32x64xf32> to vector<32x64xbf16>
    %c0_7 = arith.constant 0 : index
    %c0_8 = arith.constant 0 : index
    %c0_9 = arith.constant 0 : index
    %33 = vector.load %arg2[%c0_7, %c0_8, %c0_9] : memref<3x64x128xbf16, #tpu.memory_space<vmem>>, vector<1x64x128xbf16>
    %34 = vector.shape_cast %33 : vector<1x64x128xbf16> to vector<64x128xbf16>
    %cst_10 = arith.constant dense<0.000000e+00> : vector<32x128xf32>
    %35 = tpu.matmul %32, %34, %cst_10 {dimension_numbers = #tpu.dot_dimension_numbers<[1], [0], [0], [1], [0, 0, 1, 1], [], []>} : vector<32x64xbf16>, vector<64x128xbf16>, vector<32x128xf32> -> vector<32x128xf32>
    %36 = arith.truncf %0 : vector<32x64xf32> to vector<32x64xbf16>
    %c1 = arith.constant 1 : index
    %c0_11 = arith.constant 0 : index
    %c0_12 = arith.constant 0 : index
    %37 = vector.load %arg2[%c1, %c0_11, %c0_12] : memref<3x64x128xbf16, #tpu.memory_space<vmem>>, vector<1x64x128xbf16>
    %38 = vector.shape_cast %37 : vector<1x64x128xbf16> to vector<64x128xbf16>
    %cst_13 = arith.constant dense<0.000000e+00> : vector<32x128xf32>
    %39 = tpu.matmul %36, %38, %cst_13 {dimension_numbers = #tpu.dot_dimension_numbers<[1], [0], [0], [1], [0, 0, 1, 1], [], []>} : vector<32x64xbf16>, vector<64x128xbf16>, vector<32x128xf32> -> vector<32x128xf32>
    %40 = arith.addf %35, %39 : vector<32x128xf32>
    %41 = arith.truncf %31 : vector<32x64xf32> to vector<32x64xbf16>
    %c2 = arith.constant 2 : index
    %c0_14 = arith.constant 0 : index
    %c0_15 = arith.constant 0 : index
    %42 = vector.load %arg2[%c2, %c0_14, %c0_15] : memref<3x64x128xbf16, #tpu.memory_space<vmem>>, vector<1x64x128xbf16>
    %43 = vector.shape_cast %42 : vector<1x64x128xbf16> to vector<64x128xbf16>
    %cst_16 = arith.constant dense<0.000000e+00> : vector<32x128xf32>
    %44 = tpu.matmul %41, %43, %cst_16 {dimension_numbers = #tpu.dot_dimension_numbers<[1], [0], [0], [1], [0, 0, 1, 1], [], []>} : vector<32x64xbf16>, vector<64x128xbf16>, vector<32x128xf32> -> vector<32x128xf32>
    %45 = arith.addf %40, %44 : vector<32x128xf32>
    %c0_17 = arith.constant 0 : index
    %c0_18 = arith.constant 0 : index
    %46 = vector.load %arg3[%c0_17, %c0_18] : memref<1x128xf32, #tpu.memory_space<vmem>>, vector<1x128xf32>
    %47 = vector.broadcast %46 : vector<1x128xf32> to vector<32x128xf32>
    %48 = arith.addf %45, %47 : vector<32x128xf32>
    %cst_19 = arith.constant 0.000000e+00 : f32
    %49 = vector.broadcast %cst_19 : f32 to vector<32x128xf32>
    %50 = arith.maximumf %48, %49 : vector<32x128xf32>
    %51 = arith.truncf %50 : vector<32x128xf32> to vector<32x128xbf16>
    %c0_20 = arith.constant 0 : index
    %c0_21 = arith.constant 0 : index
    %52 = vector.load %arg4[%c0_20, %c0_21] : memref<32x128xbf16, #tpu.memory_space<vmem>>, vector<32x128xbf16>
    tpu.vector_store %arg4[%c0_20, %c0_21], %51 {strides = array<i32>} : memref<32x128xbf16, #tpu.memory_space<vmem>>, vector<32x128xbf16>,
    %cst_22 = arith.constant dense<0.000000e+00> : vector<128xf32>
    %53 = vector.multi_reduction <add>, %50, %cst_22 [0] : vector<32x128xf32> to vector<128xf32>
    %54 = vector.shape_cast %53 : vector<128xf32> to vector<1x128xf32>
    %c0_23 = arith.constant 0 : index
    %c0_24 = arith.constant 0 : index
    %c0_25 = arith.constant 0 : index
    %55 = vector.load %arg5[%c0_23, %c0_24, %c0_25] : memref<1x1x128xf32, #tpu.memory_space<vmem>>, vector<1x1x128xf32>
    %56 = vector.shape_cast %55 : vector<1x1x128xf32> to vector<1x128xf32>
    %57 = vector.shape_cast %54 : vector<1x128xf32> to vector<1x1x128xf32>
    tpu.vector_store %arg5[%c0_23, %c0_24, %c0_25], %57 {strides = array<i32>} : memref<1x1x128xf32, #tpu.memory_space<vmem>>, vector<1x1x128xf32>,
    %58 = arith.mulf %50, %50 : vector<32x128xf32>
    %cst_26 = arith.constant dense<0.000000e+00> : vector<128xf32>
    %59 = vector.multi_reduction <add>, %58, %cst_26 [0] : vector<32x128xf32> to vector<128xf32>
    %60 = vector.shape_cast %59 : vector<128xf32> to vector<1x128xf32>
    %c0_27 = arith.constant 0 : index
    %c0_28 = arith.constant 0 : index
    %c0_29 = arith.constant 0 : index
    %61 = vector.load %arg6[%c0_27, %c0_28, %c0_29] : memref<1x1x128xf32, #tpu.memory_space<vmem>>, vector<1x1x128xf32>
    %62 = vector.shape_cast %61 : vector<1x1x128xf32> to vector<1x128xf32>
    %63 = vector.shape_cast %60 : vector<1x128xf32> to vector<1x1x128xf32>
    tpu.vector_store %arg6[%c0_27, %c0_28, %c0_29], %63 {strides = array<i32>} : memref<1x1x128xf32, #tpu.memory_space<vmem>>, vector<1x1x128xf32>,
    return
  }
  func.func @transform_0(%arg0: i32) -> (i32, i32) {
    %c0_i32 = arith.constant 0 : i32
    %c0_i32_0 = arith.constant 0 : i32
    return %arg0, %c0_i32 : i32, i32
  }
  func.func @transform_1(%arg0: i32) -> (i32, i32, i32) {
    %c0_i32 = arith.constant 0 : i32
    %c0_i32_0 = arith.constant 0 : i32
    %c0_i32_1 = arith.constant 0 : i32
    %c0_i32_2 = arith.constant 0 : i32
    return %c0_i32, %c0_i32_0, %c0_i32_1 : i32, i32, i32
  }
  func.func @transform_2(%arg0: i32) -> (i32, i32) {
    %c0_i32 = arith.constant 0 : i32
    %c0_i32_0 = arith.constant 0 : i32
    %c0_i32_1 = arith.constant 0 : i32
    return %c0_i32, %c0_i32_0 : i32, i32
  }
  func.func @transform_3(%arg0: i32) -> (i32, i32) {
    %c0_i32 = arith.constant 0 : i32
    %c0_i32_0 = arith.constant 0 : i32
    return %arg0, %c0_i32 : i32, i32
  }
  func.func @transform_4(%arg0: i32) -> (i32, i32, i32) {
    %c0_i32 = arith.constant 0 : i32
    %c0_i32_0 = arith.constant 0 : i32
    %c0_i32_1 = arith.constant 0 : i32
    return %arg0, %c0_i32, %c0_i32_0 : i32, i32, i32
  }
  func.func @transform_5(%arg0: i32) -> (i32, i32, i32) {
    %c0_i32 = arith.constant 0 : i32
    %c0_i32_0 = arith.constant 0 : i32
    %c0_i32_1 = arith.constant 0 : i32
    return %arg0, %c0_i32, %c0_i32_0 : i32, i32, i32
  }
}

module attributes {stable_mosaic.version = 11 : i64} {
  func.func @_conv_rows_kernel(%arg0: i32, %arg1: memref<32x128xbf16, #tpu.memory_space<vmem>>, %arg2: memref<1x128xf32, #tpu.memory_space<vmem>>, %arg3: memref<1x128xf32, #tpu.memory_space<vmem>>, %arg4: memref<3x128x256xbf16, #tpu.memory_space<vmem>>, %arg5: memref<1x256xf32, #tpu.memory_space<vmem>>, %arg6: memref<32x256xbf16, #tpu.memory_space<vmem>>, %arg7: memref<1x1x256xf32, #tpu.memory_space<vmem>>, %arg8: memref<1x1x256xf32, #tpu.memory_space<vmem>>) attributes {dimension_semantics = [#tpu.dimension_semantics<parallel>], iteration_bounds = array<i64: 1>, scalar_prefetch = 0 : i64, scratch_operands = 0 : i64, tpu.core_type = #tpu.core_type<tc>, window_params = [{transform_indices = @transform_0, window_bounds = array<i64: 32, 128>}, {pipeline_mode = #tpu.pipeline_mode<synchronous>, transform_indices = @transform_1, window_bounds = array<i64: 1, 128>}, {pipeline_mode = #tpu.pipeline_mode<synchronous>, transform_indices = @transform_2, window_bounds = array<i64: 1, 128>}, {pipeline_mode = #tpu.pipeline_mode<synchronous>, transform_indices = @transform_3, window_bounds = array<i64: 3, 128, 256>}, {pipeline_mode = #tpu.pipeline_mode<synchronous>, transform_indices = @transform_4, window_bounds = array<i64: 1, 256>}, {transform_indices = @transform_5, window_bounds = array<i64: 32, 256>}, {transform_indices = @transform_6, window_bounds = array<i64: 1, 1, 256>}, {transform_indices = @transform_7, window_bounds = array<i64: 1, 1, 256>}]} {
    %c0 = arith.constant 0 : index
    %c0_0 = arith.constant 0 : index
    %0 = vector.load %arg1[%c0, %c0_0] : memref<32x128xbf16, #tpu.memory_space<vmem>>, vector<32x128xbf16>
    %1 = arith.extf %0 : vector<32x128xbf16> to vector<32x128xf32>
    %c0_1 = arith.constant 0 : index
    %c0_2 = arith.constant 0 : index
    %2 = vector.load %arg2[%c0_1, %c0_2] : memref<1x128xf32, #tpu.memory_space<vmem>>, vector<1x128xf32>
    %3 = vector.broadcast %2 : vector<1x128xf32> to vector<32x128xf32>
    %4 = arith.mulf %1, %3 : vector<32x128xf32>
    %c0_3 = arith.constant 0 : index
    %c0_4 = arith.constant 0 : index
    %5 = vector.load %arg3[%c0_3, %c0_4] : memref<1x128xf32, #tpu.memory_space<vmem>>, vector<1x128xf32>
    %6 = vector.broadcast %5 : vector<1x128xf32> to vector<32x128xf32>
    %7 = arith.addf %4, %6 : vector<32x128xf32>
    %cst = arith.constant 0.000000e+00 : f32
    %8 = vector.broadcast %cst : f32 to vector<32x128xf32>
    %9 = arith.maximumf %7, %8 : vector<32x128xf32>
    %10 = tpu.iota {dimensions = array<i32: 0>} : vector<32x1xi32>
    %c16_i32 = arith.constant 16 : i32
    %c0_i32 = arith.constant 0 : i32
    %11 = arith.cmpi eq, %c16_i32, %c0_i32 : i32
    %c1_i32 = arith.constant 1 : i32
    %12 = arith.select %11, %c1_i32, %c16_i32 : i32
    %13 = vector.broadcast %12 : i32 to vector<32x1xi32>
    %14 = arith.remsi %10, %13 : vector<32x1xi32>
    %c0_i32_5 = arith.constant 0 : i32
    %15 = vector.broadcast %c0_i32_5 : i32 to vector<32x1xi32>
    %16 = arith.cmpi ne, %14, %15 : vector<32x1xi32>
    %c0_i32_6 = arith.constant 0 : i32
    %17 = vector.broadcast %c0_i32_6 : i32 to vector<32x1xi32>
    %18 = arith.cmpi slt, %14, %17 : vector<32x1xi32>
    %c0_i32_7 = arith.constant 0 : i32
    %19 = arith.cmpi slt, %12, %c0_i32_7 : i32
    %20 = vector.broadcast %19 : i1 to vector<32x1xi1>
    %21 = vector.broadcast %20 : vector<32x1xi1> to vector<32x1xi1>
    %22 = arith.xori %18, %21 : vector<32x1xi1>
    %23 = arith.andi %22, %16 : vector<32x1xi1>
    %24 = vector.broadcast %12 : i32 to vector<32x1xi32>
    %25 = arith.addi %14, %24 : vector<32x1xi32>
    %26 = arith.select %23, %25, %14 : vector<32x1xi1>, vector<32x1xi32>
    %c1_i32_8 = arith.constant 1 : i32
    %27 = vector.broadcast %c1_i32_8 : i32 to vector<32x1xi32>
    %28 = arith.cmpi sge, %26, %27 : vector<32x1xi32>
    %c1_i32_9 = arith.constant 1 : i32
    %29 = tpu.dynamic_rotate %9 by %c1_i32_9 dim 0 : vector<32x128xf32>, i32 -> vector<32x128xf32>
    %cst_10 = arith.constant 0.000000e+00 : f32
    %30 = vector.shape_cast %28 : vector<32x1xi1> to vector<32x1xi1>
    %31 = vector.broadcast %30 : vector<32x1xi1> to vector<32x128xi1>
    %32 = vector.broadcast %cst_10 : f32 to vector<32x128xf32>
    %33 = arith.select %31, %29, %32 : vector<32x128xi1>, vector<32x128xf32>
    %c14_i32 = arith.constant 14 : i32
    %34 = vector.broadcast %c14_i32 : i32 to vector<32x1xi32>
    %35 = arith.cmpi sle, %26, %34 : vector<32x1xi32>
    %c31_i32 = arith.constant 31 : i32
    %36 = tpu.dynamic_rotate %9 by %c31_i32 dim 0 : vector<32x128xf32>, i32 -> vector<32x128xf32>
    %cst_11 = arith.constant 0.000000e+00 : f32
    %37 = vector.shape_cast %35 : vector<32x1xi1> to vector<32x1xi1>
    %38 = vector.broadcast %37 : vector<32x1xi1> to vector<32x128xi1>
    %39 = vector.broadcast %cst_11 : f32 to vector<32x128xf32>
    %40 = arith.select %38, %36, %39 : vector<32x128xi1>, vector<32x128xf32>
    %41 = arith.truncf %33 : vector<32x128xf32> to vector<32x128xbf16>
    %c0_12 = arith.constant 0 : index
    %c0_13 = arith.constant 0 : index
    %c0_14 = arith.constant 0 : index
    %42 = vector.load %arg4[%c0_12, %c0_13, %c0_14] : memref<3x128x256xbf16, #tpu.memory_space<vmem>>, vector<1x128x256xbf16>
    %43 = vector.shape_cast %42 : vector<1x128x256xbf16> to vector<128x256xbf16>
    %cst_15 = arith.constant dense<0.000000e+00> : vector<32x256xf32>
    %44 = tpu.matmul %41, %43, %cst_15 {dimension_numbers = #tpu.dot_dimension_numbers<[1], [0], [0], [1], [0, 0, 1, 1], [], []>} : vector<32x128xbf16>, vector<128x256xbf16>, vector<32x256xf32> -> vector<32x256xf32>
    %45 = arith.truncf %9 : vector<32x128xf32> to vector<32x128xbf16>
    %c1 = arith.constant 1 : index
    %c0_16 = arith.constant 0 : index
    %c0_17 = arith.constant 0 : index
    %46 = vector.load %arg4[%c1, %c0_16, %c0_17] : memref<3x128x256xbf16, #tpu.memory_space<vmem>>, vector<1x128x256xbf16>
    %47 = vector.shape_cast %46 : vector<1x128x256xbf16> to vector<128x256xbf16>
    %cst_18 = arith.constant dense<0.000000e+00> : vector<32x256xf32>
    %48 = tpu.matmul %45, %47, %cst_18 {dimension_numbers = #tpu.dot_dimension_numbers<[1], [0], [0], [1], [0, 0, 1, 1], [], []>} : vector<32x128xbf16>, vector<128x256xbf16>, vector<32x256xf32> -> vector<32x256xf32>
    %49 = arith.addf %44, %48 : vector<32x256xf32>
    %50 = arith.truncf %40 : vector<32x128xf32> to vector<32x128xbf16>
    %c2 = arith.constant 2 : index
    %c0_19 = arith.constant 0 : index
    %c0_20 = arith.constant 0 : index
    %51 = vector.load %arg4[%c2, %c0_19, %c0_20] : memref<3x128x256xbf16, #tpu.memory_space<vmem>>, vector<1x128x256xbf16>
    %52 = vector.shape_cast %51 : vector<1x128x256xbf16> to vector<128x256xbf16>
    %cst_21 = arith.constant dense<0.000000e+00> : vector<32x256xf32>
    %53 = tpu.matmul %50, %52, %cst_21 {dimension_numbers = #tpu.dot_dimension_numbers<[1], [0], [0], [1], [0, 0, 1, 1], [], []>} : vector<32x128xbf16>, vector<128x256xbf16>, vector<32x256xf32> -> vector<32x256xf32>
    %54 = arith.addf %49, %53 : vector<32x256xf32>
    %c0_22 = arith.constant 0 : index
    %c0_23 = arith.constant 0 : index
    %55 = vector.load %arg5[%c0_22, %c0_23] : memref<1x256xf32, #tpu.memory_space<vmem>>, vector<1x256xf32>
    %56 = vector.broadcast %55 : vector<1x256xf32> to vector<32x256xf32>
    %57 = arith.addf %54, %56 : vector<32x256xf32>
    %cst_24 = arith.constant 0.000000e+00 : f32
    %58 = vector.broadcast %cst_24 : f32 to vector<32x256xf32>
    %59 = arith.maximumf %57, %58 : vector<32x256xf32>
    %60 = arith.truncf %59 : vector<32x256xf32> to vector<32x256xbf16>
    %c0_25 = arith.constant 0 : index
    %c0_26 = arith.constant 0 : index
    %61 = vector.load %arg6[%c0_25, %c0_26] : memref<32x256xbf16, #tpu.memory_space<vmem>>, vector<32x256xbf16>
    tpu.vector_store %arg6[%c0_25, %c0_26], %60 {strides = array<i32>} : memref<32x256xbf16, #tpu.memory_space<vmem>>, vector<32x256xbf16>,
    %cst_27 = arith.constant dense<0.000000e+00> : vector<256xf32>
    %62 = vector.multi_reduction <add>, %59, %cst_27 [0] : vector<32x256xf32> to vector<256xf32>
    %63 = vector.shape_cast %62 : vector<256xf32> to vector<1x256xf32>
    %c0_28 = arith.constant 0 : index
    %c0_29 = arith.constant 0 : index
    %c0_30 = arith.constant 0 : index
    %64 = vector.load %arg7[%c0_28, %c0_29, %c0_30] : memref<1x1x256xf32, #tpu.memory_space<vmem>>, vector<1x1x256xf32>
    %65 = vector.shape_cast %64 : vector<1x1x256xf32> to vector<1x256xf32>
    %66 = vector.shape_cast %63 : vector<1x256xf32> to vector<1x1x256xf32>
    tpu.vector_store %arg7[%c0_28, %c0_29, %c0_30], %66 {strides = array<i32>} : memref<1x1x256xf32, #tpu.memory_space<vmem>>, vector<1x1x256xf32>,
    %67 = arith.mulf %59, %59 : vector<32x256xf32>
    %cst_31 = arith.constant dense<0.000000e+00> : vector<256xf32>
    %68 = vector.multi_reduction <add>, %67, %cst_31 [0] : vector<32x256xf32> to vector<256xf32>
    %69 = vector.shape_cast %68 : vector<256xf32> to vector<1x256xf32>
    %c0_32 = arith.constant 0 : index
    %c0_33 = arith.constant 0 : index
    %c0_34 = arith.constant 0 : index
    %70 = vector.load %arg8[%c0_32, %c0_33, %c0_34] : memref<1x1x256xf32, #tpu.memory_space<vmem>>, vector<1x1x256xf32>
    %71 = vector.shape_cast %70 : vector<1x1x256xf32> to vector<1x256xf32>
    %72 = vector.shape_cast %69 : vector<1x256xf32> to vector<1x1x256xf32>
    tpu.vector_store %arg8[%c0_32, %c0_33, %c0_34], %72 {strides = array<i32>} : memref<1x1x256xf32, #tpu.memory_space<vmem>>, vector<1x1x256xf32>,
    return
  }
  func.func @transform_0(%arg0: i32) -> (i32, i32) {
    %c0_i32 = arith.constant 0 : i32
    %c0_i32_0 = arith.constant 0 : i32
    return %arg0, %c0_i32 : i32, i32
  }
  func.func @transform_1(%arg0: i32) -> (i32, i32) {
    %c0_i32 = arith.constant 0 : i32
    %c0_i32_0 = arith.constant 0 : i32
    %c0_i32_1 = arith.constant 0 : i32
    return %c0_i32, %c0_i32_0 : i32, i32
  }
  func.func @transform_2(%arg0: i32) -> (i32, i32) {
    %c0_i32 = arith.constant 0 : i32
    %c0_i32_0 = arith.constant 0 : i32
    %c0_i32_1 = arith.constant 0 : i32
    return %c0_i32, %c0_i32_0 : i32, i32
  }
  func.func @transform_3(%arg0: i32) -> (i32, i32, i32) {
    %c0_i32 = arith.constant 0 : i32
    %c0_i32_0 = arith.constant 0 : i32
    %c0_i32_1 = arith.constant 0 : i32
    %c0_i32_2 = arith.constant 0 : i32
    return %c0_i32, %c0_i32_0, %c0_i32_1 : i32, i32, i32
  }
  func.func @transform_4(%arg0: i32) -> (i32, i32) {
    %c0_i32 = arith.constant 0 : i32
    %c0_i32_0 = arith.constant 0 : i32
    %c0_i32_1 = arith.constant 0 : i32
    return %c0_i32, %c0_i32_0 : i32, i32
  }
  func.func @transform_5(%arg0: i32) -> (i32, i32) {
    %c0_i32 = arith.constant 0 : i32
    %c0_i32_0 = arith.constant 0 : i32
    return %arg0, %c0_i32 : i32, i32
  }
  func.func @transform_6(%arg0: i32) -> (i32, i32, i32) {
    %c0_i32 = arith.constant 0 : i32
    %c0_i32_0 = arith.constant 0 : i32
    %c0_i32_1 = arith.constant 0 : i32
    return %arg0, %c0_i32, %c0_i32_0 : i32, i32, i32
  }
  func.func @transform_7(%arg0: i32) -> (i32, i32, i32) {
    %c0_i32 = arith.constant 0 : i32
    %c0_i32_0 = arith.constant 0 : i32
    %c0_i32_1 = arith.constant 0 : i32
    return %arg0, %c0_i32, %c0_i32_0 : i32, i32, i32
  }
}

module attributes {stable_mosaic.version = 11 : i64} {
  func.func @_bn_relu_pool_kernel(%arg0: i32, %arg1: memref<32x256xbf16, #tpu.memory_space<vmem>>, %arg2: memref<1x256xf32, #tpu.memory_space<vmem>>, %arg3: memref<1x256xf32, #tpu.memory_space<vmem>>, %arg4: memref<256x128xf32, #tpu.memory_space<vmem>>, %arg5: memref<256x128xf32, #tpu.memory_space<vmem>>, %arg6: memref<16x32xf32, #tpu.memory_space<vmem>>, %arg7: memref<16x32xf32, #tpu.memory_space<vmem>>, %arg8: memref<32x256xf32, #tpu.memory_space<vmem>>, %arg9: memref<16x128xf32, #tpu.memory_space<vmem>>) attributes {dimension_semantics = [#tpu.dimension_semantics<parallel>], iteration_bounds = array<i64: 1>, scalar_prefetch = 0 : i64, scratch_operands = 0 : i64, tpu.core_type = #tpu.core_type<tc>, window_params = [{transform_indices = @transform_0, window_bounds = array<i64: 32, 256>}, {pipeline_mode = #tpu.pipeline_mode<synchronous>, transform_indices = @transform_1, window_bounds = array<i64: 1, 256>}, {pipeline_mode = #tpu.pipeline_mode<synchronous>, transform_indices = @transform_2, window_bounds = array<i64: 1, 256>}, {pipeline_mode = #tpu.pipeline_mode<synchronous>, transform_indices = @transform_3, window_bounds = array<i64: 256, 128>}, {pipeline_mode = #tpu.pipeline_mode<synchronous>, transform_indices = @transform_4, window_bounds = array<i64: 256, 128>}, {pipeline_mode = #tpu.pipeline_mode<synchronous>, transform_indices = @transform_5, window_bounds = array<i64: 16, 32>}, {pipeline_mode = #tpu.pipeline_mode<synchronous>, transform_indices = @transform_6, window_bounds = array<i64: 16, 32>}, {transform_indices = @transform_7, window_bounds = array<i64: 32, 256>}, {transform_indices = @transform_8, window_bounds = array<i64: 16, 128>}]} {
    %c0 = arith.constant 0 : index
    %c0_0 = arith.constant 0 : index
    %0 = vector.load %arg1[%c0, %c0_0] : memref<32x256xbf16, #tpu.memory_space<vmem>>, vector<32x256xbf16>
    %1 = arith.extf %0 : vector<32x256xbf16> to vector<32x256xf32>
    %c0_1 = arith.constant 0 : index
    %c0_2 = arith.constant 0 : index
    %2 = vector.load %arg2[%c0_1, %c0_2] : memref<1x256xf32, #tpu.memory_space<vmem>>, vector<1x256xf32>
    %3 = vector.broadcast %2 : vector<1x256xf32> to vector<32x256xf32>
    %4 = arith.mulf %1, %3 : vector<32x256xf32>
    %c0_3 = arith.constant 0 : index
    %c0_4 = arith.constant 0 : index
    %5 = vector.load %arg3[%c0_3, %c0_4] : memref<1x256xf32, #tpu.memory_space<vmem>>, vector<1x256xf32>
    %6 = vector.broadcast %5 : vector<1x256xf32> to vector<32x256xf32>
    %7 = arith.addf %4, %6 : vector<32x256xf32>
    %cst = arith.constant 0.000000e+00 : f32
    %8 = vector.broadcast %cst : f32 to vector<32x256xf32>
    %9 = arith.maximumf %7, %8 : vector<32x256xf32>
    %c0_5 = arith.constant 0 : index
    %c0_6 = arith.constant 0 : index
    %10 = vector.load %arg8[%c0_5, %c0_6] : memref<32x256xf32, #tpu.memory_space<vmem>>, vector<32x256xf32>
    tpu.vector_store %arg8[%c0_5, %c0_6], %9 {strides = array<i32>} : memref<32x256xf32, #tpu.memory_space<vmem>>, vector<32x256xf32>,
    %c0_7 = arith.constant 0 : index
    %c0_8 = arith.constant 0 : index
    %11 = vector.load %arg4[%c0_7, %c0_8] : memref<256x128xf32, #tpu.memory_space<vmem>>, vector<256x128xf32>
    %cst_9 = arith.constant dense<0.000000e+00> : vector<32x128xf32>
    %12 = tpu.matmul %9, %11, %cst_9 {dimension_numbers = #tpu.dot_dimension_numbers<[1], [0], [0], [1], [0, 0, 1, 1], [], []>} : vector<32x256xf32>, vector<256x128xf32>, vector<32x128xf32> -> vector<32x128xf32>
    %c0_10 = arith.constant 0 : index
    %c0_11 = arith.constant 0 : index
    %13 = vector.load %arg5[%c0_10, %c0_11] : memref<256x128xf32, #tpu.memory_space<vmem>>, vector<256x128xf32>
    %cst_12 = arith.constant dense<0.000000e+00> : vector<32x128xf32>
    %14 = tpu.matmul %9, %13, %cst_12 {dimension_numbers = #tpu.dot_dimension_numbers<[1], [0], [0], [1], [0, 0, 1, 1], [], []>} : vector<32x256xf32>, vector<256x128xf32>, vector<32x128xf32> -> vector<32x128xf32>
    %15 = arith.maximumf %12, %14 : vector<32x128xf32>
    %c0_13 = arith.constant 0 : index
    %c0_14 = arith.constant 0 : index
    %16 = vector.load %arg6[%c0_13, %c0_14] : memref<16x32xf32, #tpu.memory_space<vmem>>, vector<16x32xf32>
    %cst_15 = arith.constant dense<0.000000e+00> : vector<16x128xf32>
    %17 = tpu.matmul %16, %15, %cst_15 {dimension_numbers = #tpu.dot_dimension_numbers<[1], [0], [0], [1], [0, 0, 1, 1], [], []>} : vector<16x32xf32>, vector<32x128xf32>, vector<16x128xf32> -> vector<16x128xf32>
    %c0_16 = arith.constant 0 : index
    %c0_17 = arith.constant 0 : index
    %18 = vector.load %arg7[%c0_16, %c0_17] : memref<16x32xf32, #tpu.memory_space<vmem>>, vector<16x32xf32>
    %cst_18 = arith.constant dense<0.000000e+00> : vector<16x128xf32>
    %19 = tpu.matmul %18, %15, %cst_18 {dimension_numbers = #tpu.dot_dimension_numbers<[1], [0], [0], [1], [0, 0, 1, 1], [], []>} : vector<16x32xf32>, vector<32x128xf32>, vector<16x128xf32> -> vector<16x128xf32>
    %20 = arith.maximumf %17, %19 : vector<16x128xf32>
    %c0_19 = arith.constant 0 : index
    %c0_20 = arith.constant 0 : index
    %21 = vector.load %arg9[%c0_19, %c0_20] : memref<16x128xf32, #tpu.memory_space<vmem>>, vector<16x128xf32>
    tpu.vector_store %arg9[%c0_19, %c0_20], %20 {strides = array<i32>} : memref<16x128xf32, #tpu.memory_space<vmem>>, vector<16x128xf32>,
    return
  }
  func.func @transform_0(%arg0: i32) -> (i32, i32) {
    %c0_i32 = arith.constant 0 : i32
    %c0_i32_0 = arith.constant 0 : i32
    return %arg0, %c0_i32 : i32, i32
  }
  func.func @transform_1(%arg0: i32) -> (i32, i32) {
    %c0_i32 = arith.constant 0 : i32
    %c0_i32_0 = arith.constant 0 : i32
    %c0_i32_1 = arith.constant 0 : i32
    return %c0_i32, %c0_i32_0 : i32, i32
  }
  func.func @transform_2(%arg0: i32) -> (i32, i32) {
    %c0_i32 = arith.constant 0 : i32
    %c0_i32_0 = arith.constant 0 : i32
    %c0_i32_1 = arith.constant 0 : i32
    return %c0_i32, %c0_i32_0 : i32, i32
  }
  func.func @transform_3(%arg0: i32) -> (i32, i32) {
    %c0_i32 = arith.constant 0 : i32
    %c0_i32_0 = arith.constant 0 : i32
    %c0_i32_1 = arith.constant 0 : i32
    return %c0_i32, %c0_i32_0 : i32, i32
  }
  func.func @transform_4(%arg0: i32) -> (i32, i32) {
    %c0_i32 = arith.constant 0 : i32
    %c0_i32_0 = arith.constant 0 : i32
    %c0_i32_1 = arith.constant 0 : i32
    return %c0_i32, %c0_i32_0 : i32, i32
  }
  func.func @transform_5(%arg0: i32) -> (i32, i32) {
    %c0_i32 = arith.constant 0 : i32
    %c0_i32_0 = arith.constant 0 : i32
    %c0_i32_1 = arith.constant 0 : i32
    return %c0_i32, %c0_i32_0 : i32, i32
  }
  func.func @transform_6(%arg0: i32) -> (i32, i32) {
    %c0_i32 = arith.constant 0 : i32
    %c0_i32_0 = arith.constant 0 : i32
    %c0_i32_1 = arith.constant 0 : i32
    return %c0_i32, %c0_i32_0 : i32, i32
  }
  func.func @transform_7(%arg0: i32) -> (i32, i32) {
    %c0_i32 = arith.constant 0 : i32
    %c0_i32_0 = arith.constant 0 : i32
    return %arg0, %c0_i32 : i32, i32
  }
  func.func @transform_8(%arg0: i32) -> (i32, i32) {
    %c0_i32 = arith.constant 0 : i32
    %c0_i32_0 = arith.constant 0 : i32
    return %arg0, %c0_i32 : i32, i32
  }
}

</mosaic_0001>

<llo_original>
// kernel: tile.33
$region0: #{tile.33}
  #allocation0 [shape = 's32[1]{0}', space=sflag, size = 0x4, scoped, tag = 'scoped memory for tile.33']
  %s0 = inlined_call_operand.vmem [shape: f32[8], index: 0, kind: input, shape index: {}]
  %s1 = inlined_call_operand.vmem [shape: f32[16,8], index: 1, kind: output, shape index: {}]
  // Predicated region
  $region2: #{tile.33} parent=0 // pred_check
    _
  $region3: #{tile.33} parent=0 // pred_check_branch
    %3 = sbr.rel (0) target = $region5
  $region4: #{tile.33} parent=0 // pred_region
    _
  $region5: #{tile.33} parent=0 // pred_fallthru
    _
  %v4 = vld [vmem:[%s0] ss:$0 sm:$0xff]
  %5 = vst [vmem:[%s1] sm:$0xff] %v4
  %s6 = scalar_lea.vmem %s1, 8
  %7 = vst [vmem:[%s6] sm:$0xff] %v4

// kernel: tile.34
$region0: #{tile.34}
  %s0 = inlined_call_operand.vmem [shape: f32[16,8], index: 0, kind: input, shape index: {}]
  %s1 = inlined_call_operand.vmem [shape: f32[1,128], index: 1, kind: output, shape index: {}]
  $region1: #{tile.34} parent=0
    #allocation0 [shape = 'u8[4096]{0}', space=vmem, size = 0x1000, scoped, tag = 'scoped mem for output reshape']
    %v2 = vld [vmem:[%s0] sm:$0x1]
    %vm3 = vcmask 64512
    %4 = vst.msk [vmem:[#allocation0] sm:$0x1] %vm3, %v2
    %s5 = scalar_lea.vmem %s0, 15
    %v6 = vld [vmem:[%s5] sm:$0x1]
    %7 = vrot.lane.b32.xlu0 %v6, 120
    %v8 = vpop.permute.xlu0 %7
    %vm9 = vcmask 1048512
    %10 = vst.msk [vmem:[#allocation0] sm:$0x1] %vm9, %v8
    %s11 = scalar_lea.vmem %s0, 14
    %v12 = vld [vmem:[%s11] sm:$0x1]
    %13 = vrot.lane.b32.xlu0 %v12, 112
    %v14 = vpop.permute.xlu0 %13
    %vm15 = vcmask 982912
    %16 = vst.msk [vmem:[#allocation0] sm:$0x1] %vm15, %v14
    %s17 = scalar_lea.vmem %s0, 13
    %v18 = vld [vmem:[%s17] sm:$0x1]
    %19 = vrot.lane.b32.xlu0 %v18, 104
    %v20 = vpop.permute.xlu0 %19
    %vm21 = vcmask 917312
    %22 = vst.msk [vmem:[#allocation0] sm:$0x1] %vm21, %v20
    %s23 = scalar_lea.vmem %s0, 12
    %v24 = vld [vmem:[%s23] sm:$0x1]
    %25 = vrot.lane.b32.xlu0 %v24, 96
    %v26 = vpop.permute.xlu0 %25
    %vm27 = vcmask 851712
    %28 = vst.msk [vmem:[#allocation0] sm:$0x1] %vm27, %v26
    %s29 = scalar_lea.vmem %s0, 11
    %v30 = vld [vmem:[%s29] sm:$0x1]
    %31 = vrot.lane.b32.xlu0 %v30, 88
    %v32 = vpop.permute.xlu0 %31
    %vm33 = vcmask 786112
    %34 = vst.msk [vmem:[#allocation0] sm:$0x1] %vm33, %v32
    %s35 = scalar_lea.vmem %s0, 10
    %v36 = vld [vmem:[%s35] sm:$0x1]
    %37 = vrot.lane.b32.xlu0 %v36, 80
    %v38 = vpop.permute.xlu0 %37
    %vm39 = vcmask 720512
    %40 = vst.msk [vmem:[#allocation0] sm:$0x1] %vm39, %v38
    %s41 = scalar_lea.vmem %s0, 9
    %v42 = vld [vmem:[%s41] sm:$0x1]
    %43 = vrot.lane.b32.xlu0 %v42, 72
    %v44 = vpop.permute.xlu0 %43
    %vm45 = vcmask 654912
    %46 = vst.msk [vmem:[#allocation0] sm:$0x1] %vm45, %v44
    %s47 = scalar_lea.vmem %s0, 8
    %v48 = vld [vmem:[%s47] sm:$0x1]
    %49 = vrot.lane.b32.xlu0 %v48, 64
    %v50 = vpop.permute.xlu0 %49
    %vm51 = vcmask 589312
    %52 = vst.msk [vmem:[#allocation0] sm:$0x1] %vm51, %v50
    %s53 = scalar_lea.vmem %s0, 7
    %v54 = vld [vmem:[%s53] sm:$0x1]
    %55 = vrot.lane.b32.xlu0 %v54, 56
    %v56 = vpop.permute.xlu0 %55
    %vm57 = vcmask 523712
    %58 = vst.msk [vmem:[#allocation0] sm:$0x1] %vm57, %v56
    %s59 = scalar_lea.vmem %s0, 6
    %v60 = vld [vmem:[%s59] sm:$0x1]
    %61 = vrot.lane.b32.xlu0 %v60, 48
    %v62 = vpop.permute.xlu0 %61
    %vm63 = vcmask 458112
    %64 = vst.msk [vmem:[#allocation0] sm:$0x1] %vm63, %v62
    %s65 = scalar_lea.vmem %s0, 5
    %v66 = vld [vmem:[%s65] sm:$0x1]
    %67 = vrot.lane.b32.xlu0 %v66, 40
    %v68 = vpop.permute.xlu0 %67
    %vm69 = vcmask 392512
    %70 = vst.msk [vmem:[#allocation0] sm:$0x1] %vm69, %v68
    %s71 = scalar_lea.vmem %s0, 4
    %v72 = vld [vmem:[%s71] sm:$0x1]
    %73 = vrot.lane.b32.xlu0 %v72, 32
    %v74 = vpop.permute.xlu0 %73
    %vm75 = vcmask 326912
    %76 = vst.msk [vmem:[#allocation0] sm:$0x1] %vm75, %v74
    %s77 = scalar_lea.vmem %s0, 3
    %v78 = vld [vmem:[%s77] sm:$0x1]
    %79 = vrot.lane.b32.xlu0 %v78, 24
    %v80 = vpop.permute.xlu0 %79
    %vm81 = vcmask 261312
    %82 = vst.msk [vmem:[#allocation0] sm:$0x1] %vm81, %v80
    %s83 = scalar_lea.vmem %s0, 2
    %v84 = vld [vmem:[%s83] sm:$0x1]
    %85 = vrot.lane.b32.xlu0 %v84, 16
    %v86 = vpop.permute.xlu0 %85
    %vm87 = vcmask 195712
    %88 = vst.msk [vmem:[#allocation0] sm:$0x1] %vm87, %v86
    %s89 = scalar_lea.vmem %s0, 1
    %v90 = vld [vmem:[%s89] sm:$0x1]
    %91 = vrot.lane.b32.xlu0 %v90, 8
    %v92 = vpop.permute.xlu0 %91
    %vm93 = vcmask 130112
    %94 = vst.msk [vmem:[#allocation0] sm:$0x1] %vm93, %v92
    %s96 = sshllo.u32 0, 1
    %v98 = vld [vmem:[#allocation0] sm:%s96]
    %s99 = sshllo.u32 0, 1
    %100 = vst [vmem:[%s1] sm:%s99] %v98

// kernel: reduction_block_forward.3
$region0: #{reduction_block_forward.3}
  #allocation0 [shape = 'u32[]', space=smem, size = 0x4, offset = 0x4, fixed_abs, tag = 'smem constant byte address 0x4 - core index']
  #allocation1 [shape = 'u32[144,128]{1,0:T(1,128)}', space=vmem, size = 0x12000, scoped, tag = 'internal scratch']
  %s0 = inlined_call_operand.vmem [shape: f32[32,64], index: 0, kind: input, shape index: {}]
  %s1 = inlined_call_operand.vmem [shape: bf16[3,64,128], index: 1, kind: input, shape index: {}]
  %s2 = inlined_call_operand.vmem [shape: f32[1,128], index: 2, kind: input, shape index: {}]
  %s3 = inlined_call_operand.vmem [shape: bf16[32,128], index: 3, kind: output, shape index: {0}]
  %s4 = inlined_call_operand.vmem [shape: f32[1,1,128], index: 4, kind: output, shape index: {1}]
  %s5 = inlined_call_operand.vmem [shape: f32[1,1,128], index: 5, kind: output, shape index: {2}]
  %6 = xla_tuple %s3, %s4, %s5
  %s7 = sld [smem:[#allocation0]]
  $region38: #{reduction_block_forward.3} parent=0
    _
  %s9 = ssub.s32 1, %s7
  %s10 = scalar_select 0, %s9, %s7
  // Predicated region
  $region2: #{reduction_block_forward.3} parent=0 // pred_check
    _
  $region3: #{reduction_block_forward.3} parent=0 // pred_check_branch
    %12 = sbr.rel (0) target = $region5
  $region4: #{reduction_block_forward.3} parent=0 // pred_region
    _
  $region5: #{reduction_block_forward.3} parent=0 // pred_fallthru
    _
  // Predicated region
  $region6: #{reduction_block_forward.3} parent=0 // pred_check
    _
  $region7: #{reduction_block_forward.3} parent=0 // pred_check_branch
    %14 = sbr.rel (0) target = $region9
  $region8: #{reduction_block_forward.3} parent=0 // pred_region
    _
  $region9: #{reduction_block_forward.3} parent=0 // pred_fallthru
    _
  // Predicated region
  $region10: #{reduction_block_forward.3} parent=0 // pred_check
    _
  $region11: #{reduction_block_forward.3} parent=0 // pred_check_branch
    %16 = sbr.rel (0) target = $region13
  $region12: #{reduction_block_forward.3} parent=0 // pred_region
    _
  $region13: #{reduction_block_forward.3} parent=0 // pred_fallthru
    _
  %v18 = vld [vmem:[%s0] sm:$0xff]
  %v19 = vld [vmem:[%s0 + $0x8] sm:$0xff]
  %v20 = vld [vmem:[%s0 + $0x10] sm:$0xff]
  %v21 = vld [vmem:[%s0 + $0x18] sm:$0xff]
  %v22 = vlaneseq
  %v23 = vshrl.u32 %v22, 7
  %v24 = vadd.s32 %v23, 8
  %v25 = vadd.s32 %v23, 16
  %v26 = vadd.s32 %v23, 24
  %vm27 = vcmp.lt.s32.totalorder %v23, 0
  %v28 = vsub.s32 0, %v23
  %v29 = vsel %vm27, %v28, %v23
  %v30 = vshrl.u32 %v29, 4
  %v31 = vand.u32 %v29, 15
  %v32 = vsub.s32 0, %v31
  %v33 = vsel %vm27, %v32, %v31
  %vm34 = vcmp.lt.s32.totalorder %v24, 0
  %v35 = vsub.s32 0, %v24
  %v36 = vsel %vm34, %v35, %v24
  %v37 = vshrl.u32 %v36, 4
  %v38 = vand.u32 %v36, 15
  %v39 = vsub.s32 0, %v38
  %v40 = vsel %vm34, %v39, %v38
  %vm41 = vcmp.lt.s32.totalorder %v25, 0
  %v42 = vsub.s32 0, %v25
  %v43 = vsel %vm41, %v42, %v25
  %v44 = vshrl.u32 %v43, 4
  %v45 = vand.u32 %v43, 15
  %v46 = vsub.s32 0, %v45
  %v47 = vsel %vm41, %v46, %v45
  %vm48 = vcmp.lt.s32.totalorder %v26, 0
  %v49 = vsub.s32 0, %v26
  %v50 = vsel %vm48, %v49, %v26
  %v51 = vshrl.u32 %v50, 4
  %v52 = vand.u32 %v50, 15
  %v53 = vsub.s32 0, %v52
  %v54 = vsel %vm48, %v53, %v52
  %vm55 = vcmp.ne.s32.totalorder %v33, 0
  %vm56 = vcmp.ne.s32.totalorder %v40, 0
  %vm57 = vcmp.ne.s32.totalorder %v47, 0
  %vm58 = vcmp.ne.s32.totalorder %v54, 0
  %vm59 = vcmp.lt.s32.totalorder %v33, 0
  %vm60 = vcmp.lt.s32.totalorder %v40, 0
  %vm61 = vcmp.lt.s32.totalorder %v47, 0
  %vm62 = vcmp.lt.s32.totalorder %v54, 0
  %vm63 = vmand %vm59, %vm55
  %vm64 = vmand %vm60, %vm56
  %vm65 = vmand %vm61, %vm57
  %vm66 = vmand %vm62, %vm58
  %v67 = vadd.s32 %v33, 16
  %v68 = vadd.s32 %v40, 16
  %v69 = vadd.s32 %v47, 16
  %v70 = vadd.s32 %v54, 16
  %v71 = vsel %vm63, %v67, %v33
  %v72 = vsel %vm64, %v68, %v40
  %v73 = vsel %vm65, %v69, %v47
  %v74 = vsel %vm66, %v70, %v54
  %vm75 = vcmp.ge.s32.totalorder %v71, 1
  %vm76 = vcmp.ge.s32.totalorder %v72, 1
  %vm77 = vcmp.ge.s32.totalorder %v73, 1
  %vm78 = vcmp.ge.s32.totalorder %v74, 1
  %v79 = vrot.slane %v18, 7
  %v80 = vrot.slane %v19, 7
  %v81 = vrot.slane %v20, 7
  %v82 = vrot.slane %v21, 7
  %vm83 = vcmp.lt.s32.totalorder %v23, 1
  %v84 = vsel %vm83, %v81, %v82
  %v85 = vsel %vm83, %v80, %v81
  %v86 = vsel %vm83, %v79, %v80
  %v87 = vsel %vm83, %v82, %v79
  %v88 = vsel %vm75, 1, 0
  %v89 = vsel %vm76, 1, 0
  %v90 = vsel %vm77, 1, 0
  %v91 = vsel %vm78, 1, 0
  %vm92 = vcmp.eq.s32.totalorder %v88, 1
  %vm93 = vcmp.eq.s32.totalorder %v89, 1
  %vm94 = vcmp.eq.s32.totalorder %v90, 1
  %vm95 = vcmp.eq.s32.totalorder %v91, 1
  %v96 = vsel %vm92, %v87, 0.0
  %v97 = vsel %vm93, %v86, 0.0
  %v98 = vsel %vm94, %v85, 0.0
  %v99 = vsel %vm95, %v84, 0.0
  %vm100 = vcmp.le.s32.totalorder %v71, 14
  %vm101 = vcmp.le.s32.totalorder %v72, 14
  %vm102 = vcmp.le.s32.totalorder %v73, 14
  %vm103 = vcmp.le.s32.totalorder %v74, 14
  %v104 = vrot.slane %v18, 1
  %v105 = vrot.slane %v19, 1
  %v106 = vrot.slane %v20, 1
  %v107 = vrot.slane %v21, 1
  %vm108 = vcmp.lt.s32.totalorder %v23, 7
  %v109 = vsel %vm108, %v106, %v107
  %v110 = vsel %vm108, %v105, %v106
  %v111 = vsel %vm108, %v104, %v105
  %v112 = vsel %vm108, %v107, %v104
  %v113 = vsel %vm100, 1, 0
  %v114 = vsel %vm101, 1, 0
  %v115 = vsel %vm102, 1, 0
  %v116 = vsel %vm103, 1, 0
  %vm117 = vcmp.eq.s32.totalorder %v113, 1
  %vm118 = vcmp.eq.s32.totalorder %v114, 1
  %vm119 = vcmp.eq.s32.totalorder %v115, 1
  %vm120 = vcmp.eq.s32.totalorder %v116, 1
  %v121 = vsel %vm117, %v111, 0.0
  %v122 = vsel %vm118, %v110, 0.0
  %v123 = vsel %vm119, %v109, 0.0
  %v124 = vsel %vm120, %v112, 0.0
  %v125 = vpack.c.bf16 %v97, %v96
  %v126 = vpack.c.bf16 %v99, %v98
  %v127 = vld [vmem:[%s1] sm:$0xf]
  %v128 = vld [vmem:[%s1 + $0x4] sm:$0xf]
  %v129 = vld [vmem:[%s1 + $0x8] sm:$0xf]
  %v130 = vld [vmem:[%s1 + $0xc] sm:$0xf]
  %v131 = vld [vmem:[%s1 + $0x10] sm:$0xf]
  %v132 = vld [vmem:[%s1 + $0x14] sm:$0xf]
  %v133 = vld [vmem:[%s1 + $0x18] sm:$0xf]
  %v134 = vld [vmem:[%s1 + $0x1c] sm:$0xf]
  %v135 = vpack.c.bf16 %v19, %v18
  %v136 = vpack.c.bf16 %v21, %v20
  %s137 = scalar_lea.vmem %s1, 32
  %v138 = vld [vmem:[%s137] sm:$0xf]
  %v139 = vld [vmem:[%s137 + $0x4] sm:$0xf]
  %v140 = vld [vmem:[%s137 + $0x8] sm:$0xf]
  %v141 = vld [vmem:[%s137 + $0xc] sm:$0xf]
  %v142 = vld [vmem:[%s137 + $0x10] sm:$0xf]
  %v143 = vld [vmem:[%s137 + $0x14] sm:$0xf]
  %v144 = vld [vmem:[%s137 + $0x18] sm:$0xf]
  %v145 = vld [vmem:[%s137 + $0x1c] sm:$0xf]
  %v154 = vunpack.c.l.b16 %v138
  %v155 = vunpack.c.l.b16 %v139
  %v156 = vunpack.c.l.b16 %v140
  %v157 = vunpack.c.l.b16 %v141
  %v158 = vunpack.c.l.b16 %v142
  %v159 = vunpack.c.l.b16 %v143
  %v160 = vunpack.c.l.b16 %v144
  %v161 = vunpack.c.l.b16 %v145
  %v162 = vpack.c.b16 %v155, %v154
  %v163 = vpack.c.b16 %v157, %v156
  %v164 = vpack.c.b16 %v159, %v158
  %v165 = vpack.c.b16 %v161, %v160
  %vm170 = vcmask 523264
  %v172 = vsel %vm170, %v135, 0
  %v175 = vsel %vm170, %v136, 0
  %177 = vmatprep.subr.bf16.mxu0 0
  %178 = vmatpush1.bf16.msra.mxu0 %v162
  %179 = vmatprep.subr.bf16.mxu0 0
  %180 = vmatpush1.bf16.msra.mxu0 %v163
  %181 = vmatprep.subr.bf16.mxu0 0
  %182 = vmatpush1.bf16.msra.mxu0 %v164
  %183 = vmatprep.subr.bf16.mxu0 0
  %184 = vmatpush1.bf16.msra.mxu0 %v165
  %185 = vmatprep.subr.bf16.mxu0 0
  %186 = vmatpush1.bf16.msra.mxu0 0
  %187 = vmatprep.subr.bf16.mxu0 0
  %188 = vmatpush1.bf16.msra.mxu0 0
  %189 = vmatprep.subr.bf16.mxu0 0
  %190 = vmatpush1.bf16.msra.mxu0 0
  %191 = vmatprep.subr.bf16.mxu0 0
  %192 = vmatpush1.bf16.msra.mxu0 0
  %193 = vmatprep.subr.bf16.mxu0 0
  %194 = vmatpush1.bf16.msra.mxu0 0
  %195 = vmatprep.subr.bf16.mxu0 0
  %196 = vmatpush1.bf16.msra.mxu0 0
  %197 = vmatprep.subr.bf16.mxu0 0
  %198 = vmatpush1.bf16.msra.mxu0 0
  %199 = vmatprep.subr.bf16.mxu0 0
  %200 = vmatpush1.bf16.msra.mxu0 0
  %201 = vmatprep.subr.bf16.mxu0 0
  %202 = vmatpush1.bf16.msra.mxu0 0
  %203 = vmatprep.subr.bf16.mxu0 0
  %204 = vmatpush1.bf16.msra.mxu0 0
  %205 = vmatprep.subr.bf16.mxu0 0
  %206 = vmatpush1.bf16.msra.mxu0 0
  %207 = vmatprep.subr.bf16.mxu0 0
  %208 = vmatpush1.bf16.msra.mxu0 0
  %209 = vmatprep.mubr.bf16.mxu0 0
  %210 = vmatmul.mubr.bf16.gmra.mrb[0].mxu0 %v172
  %v211 = vpop.f32.mrb[0].mxu0
  %v212 = vadd.f32 0.0, %v211
  %v213 = vpop.f32.mrb[0].mxu0
  %v214 = vpop.f32.mrb[0].mxu0
  %v215 = vadd.f32 0.0, %v214
  %v216 = vpop.f32.mrb[0].mxu0
  %217 = vmatprep.mubr.bf16.mxu0 0
  %218 = vmatmul.mubr.bf16.gmra.mrb[0].mxu0 %v175
  %v219 = vpop.f32.mrb[0].mxu0
  %v220 = vadd.f32 0.0, %v219
  %v221 = vpop.f32.mrb[0].mxu0
  %v222 = vpop.f32.mrb[0].mxu0
  %v223 = vadd.f32 0.0, %v222
  %v224 = vpop.f32.mrb[0].mxu0
  %225 = vdwg.mxu0
  %v234 = vunpack.c.l.b16 %v127
  %v235 = vunpack.c.l.b16 %v128
  %v236 = vunpack.c.l.b16 %v129
  %v237 = vunpack.c.l.b16 %v130
  %v238 = vunpack.c.l.b16 %v131
  %v239 = vunpack.c.l.b16 %v132
  %v240 = vunpack.c.l.b16 %v133
  %v241 = vunpack.c.l.b16 %v134
  %v242 = vpack.c.b16 %v235, %v234
  %v243 = vpack.c.b16 %v237, %v236
  %v244 = vpack.c.b16 %v239, %v238
  %v245 = vpack.c.b16 %v241, %v240
  %v251 = vsel %vm170, %v125, 0
  %v254 = vsel %vm170, %v126, 0
  %256 = vmatprep.subr.bf16.mxu0 0
  %257 = vmatpush1.bf16.msra.mxu0 %v242
  %258 = vmatprep.subr.bf16.mxu0 0
  %259 = vmatpush1.bf16.msra.mxu0 %v243
  %260 = vmatprep.subr.bf16.mxu0 0
  %261 = vmatpush1.bf16.msra.mxu0 %v244
  %262 = vmatprep.subr.bf16.mxu0 0
  %263 = vmatpush1.bf16.msra.mxu0 %v245
  %264 = vmatprep.subr.bf16.mxu0 0
  %265 = vmatpush1.bf16.msra.mxu0 0
  %266 = vmatprep.subr.bf16.mxu0 0
  %267 = vmatpush1.bf16.msra.mxu0 0
  %268 = vmatprep.subr.bf16.mxu0 0
  %269 = vmatpush1.bf16.msra.mxu0 0
  %270 = vmatprep.subr.bf16.mxu0 0
  %271 = vmatpush1.bf16.msra.mxu0 0
  %272 = vmatprep.subr.bf16.mxu0 0
  %273 = vmatpush1.bf16.msra.mxu0 0
  %274 = vmatprep.subr.bf16.mxu0 0
  %275 = vmatpush1.bf16.msra.mxu0 0
  %276 = vmatprep.subr.bf16.mxu0 0
  %277 = vmatpush1.bf16.msra.mxu0 0
  %278 = vmatprep.subr.bf16.mxu0 0
  %279 = vmatpush1.bf16.msra.mxu0 0
  %280 = vmatprep.subr.bf16.mxu0 0
  %281 = vmatpush1.bf16.msra.mxu0 0
  %282 = vmatprep.subr.bf16.mxu0 0
  %283 = vmatpush1.bf16.msra.mxu0 0
  %284 = vmatprep.subr.bf16.mxu0 0
  %285 = vmatpush1.bf16.msra.mxu0 0
  %286 = vmatprep.subr.bf16.mxu0 0
  %287 = vmatpush1.bf16.msra.mxu0 0
  %288 = vmatprep.mubr.bf16.mxu0 0
  %289 = vmatmul.mubr.bf16.gmra.mrb[0].mxu0 %v251
  %v290 = vpop.f32.mrb[0].mxu0
  %v291 = vadd.f32 %v212, %v290
  %v292 = vpop.f32.mrb[0].mxu0
  %v293 = vpop.f32.mrb[0].mxu0
  %v294 = vadd.f32 %v215, %v293
  %v295 = vpop.f32.mrb[0].mxu0
  %296 = vmatprep.mubr.bf16.mxu0 0
  %297 = vmatmul.mubr.bf16.gmra.mrb[0].mxu0 %v254
  %v298 = vpop.f32.mrb[0].mxu0
  %v299 = vadd.f32 %v220, %v298
  %v300 = vpop.f32.mrb[0].mxu0
  %v301 = vpop.f32.mrb[0].mxu0
  %v302 = vadd.f32 %v223, %v301
  %v303 = vpop.f32.mrb[0].mxu0
  %304 = vdwg.mxu0
  %v305 = vpack.c.bf16 %v122, %v121
  %v306 = vpack.c.bf16 %v124, %v123
  %s307 = scalar_lea.vmem %s1, 64
  %v308 = vld [vmem:[%s307] sm:$0xf]
  %v309 = vld [vmem:[%s307 + $0x4] sm:$0xf]
  %v310 = vld [vmem:[%s307 + $0x8] sm:$0xf]
  %v311 = vld [vmem:[%s307 + $0xc] sm:$0xf]
  %v312 = vld [vmem:[%s307 + $0x10] sm:$0xf]
  %v313 = vld [vmem:[%s307 + $0x14] sm:$0xf]
  %v314 = vld [vmem:[%s307 + $0x18] sm:$0xf]
  %v315 = vld [vmem:[%s307 + $0x1c] sm:$0xf]
  %v324 = vunpack.c.l.b16 %v308
  %v325 = vunpack.c.l.b16 %v309
  %v326 = vunpack.c.l.b16 %v310
  %v327 = vunpack.c.l.b16 %v311
  %v328 = vunpack.c.l.b16 %v312
  %v329 = vunpack.c.l.b16 %v313
  %v330 = vunpack.c.l.b16 %v314
  %v331 = vunpack.c.l.b16 %v315
  %v332 = vpack.c.b16 %v325, %v324
  %v333 = vpack.c.b16 %v327, %v326
  %v334 = vpack.c.b16 %v329, %v328
  %v335 = vpack.c.b16 %v331, %v330
  %v341 = vsel %vm170, %v305, 0
  %v344 = vsel %vm170, %v306, 0
  %346 = vmatprep.subr.bf16.mxu0 0
  %347 = vmatpush1.bf16.msra.mxu0 %v332
  %348 = vmatprep.subr.bf16.mxu0 0
  %349 = vmatpush1.bf16.msra.mxu0 %v333
  %350 = vmatprep.subr.bf16.mxu0 0
  %351 = vmatpush1.bf16.msra.mxu0 %v334
  %352 = vmatprep.subr.bf16.mxu0 0
  %353 = vmatpush1.bf16.msra.mxu0 %v335
  %354 = vmatprep.subr.bf16.mxu0 0
  %355 = vmatpush1.bf16.msra.mxu0 0
  %356 = vmatprep.subr.bf16.mxu0 0
  %357 = vmatpush1.bf16.msra.mxu0 0
  %358 = vmatprep.subr.bf16.mxu0 0
  %359 = vmatpush1.bf16.msra.mxu0 0
  %360 = vmatprep.subr.bf16.mxu0 0
  %361 = vmatpush1.bf16.msra.mxu0 0
  %362 = vmatprep.subr.bf16.mxu0 0
  %363 = vmatpush1.bf16.msra.mxu0 0
  %364 = vmatprep.subr.bf16.mxu0 0
  %365 = vmatpush1.bf16.msra.mxu0 0
  %366 = vmatprep.subr.bf16.mxu0 0
  %367 = vmatpush1.bf16.msra.mxu0 0
  %368 = vmatprep.subr.bf16.mxu0 0
  %369 = vmatpush1.bf16.msra.mxu0 0
  %370 = vmatprep.subr.bf16.mxu0 0
  %371 = vmatpush1.bf16.msra.mxu0 0
  %372 = vmatprep.subr.bf16.mxu0 0
  %373 = vmatpush1.bf16.msra.mxu0 0
  %374 = vmatprep.subr.bf16.mxu0 0
  %375 = vmatpush1.bf16.msra.mxu0 0
  %376 = vmatprep.subr.bf16.mxu0 0
  %377 = vmatpush1.bf16.msra.mxu0 0
  %378 = vmatprep.mubr.bf16.mxu0 0
  %379 = vmatmul.mubr.bf16.gmra.mrb[0].mxu0 %v341
  %v380 = vpop.f32.mrb[0].mxu0
  %v381 = vadd.f32 0.0, %v380
  %v382 = vpop.f32.mrb[0].mxu0
  %v383 = vpop.f32.mrb[0].mxu0
  %v384 = vadd.f32 0.0, %v383
  %v385 = vpop.f32.mrb[0].mxu0
  %386 = vmatprep.mubr.bf16.mxu0 0
  %387 = vmatmul.mubr.bf16.gmra.mrb[0].mxu0 %v344
  %v388 = vpop.f32.mrb[0].mxu0
  %v389 = vadd.f32 0.0, %v388
  %v390 = vpop.f32.mrb[0].mxu0
  %v391 = vpop.f32.mrb[0].mxu0
  %v392 = vadd.f32 0.0, %v391
  %v393 = vpop.f32.mrb[0].mxu0
  %394 = vdwg.mxu0
  %v395 = vadd.f32 %v291, %v381
  %v396 = vadd.f32 %v294, %v384
  %v397 = vadd.f32 %v299, %v389
  %v398 = vadd.f32 %v302, %v392
  %v399 = vld [vmem:[%s2] sm:$0x1]
  %v401 = vlaneseq
  %v402 = vshrl.u32 %v401, 7
  %v403 = vsub.s32 0, %v402
  %v404 = vrot.slane %v399, %v403
  %v406 = vadd.f32 %v395, %v404
  %v407 = vadd.f32 %v396, %v404
  %v408 = vadd.f32 %v397, %v404
  %v409 = vadd.f32 %v398, %v404
  %v410 = vmax.f32 %v406, 0.0
  %v411 = vmax.f32 %v407, 0.0
  %v412 = vmax.f32 %v408, 0.0
  %v413 = vmax.f32 %v409, 0.0
  %v414 = vpack.c.bf16 %v411, %v410
  %v415 = vpack.c.bf16 %v413, %v412
  %v418 = vunpack.c.l.b16 %v414
  %v419 = vunpack.c.h.b16 %v414
  %v420 = vunpack.c.l.b16 %v415
  %v421 = vunpack.c.h.b16 %v415
  %v422 = vpack.c.b16 %v418, %v418
  %v423 = vpack.c.b16 %v419, %v419
  %v424 = vpack.c.b16 %v420, %v420
  %v425 = vpack.c.b16 %v421, %v421
  %430 = vst [vmem:[%s3] sm:$0xf] %v422
  %431 = vst [vmem:[%s3 + $0x4] sm:$0xf] %v423
  %432 = vst [vmem:[%s3 + $0x8] sm:$0xf] %v424
  %433 = vst [vmem:[%s3 + $0xc] sm:$0xf] %v425
  %v434 = vadd.f32 %v410, %v411
  %v435 = vadd.f32 %v434, %v412
  %v436 = vadd.f32 %v435, %v413
  %v437 = vrot.slane %v436, 4
  %v438 = vadd.f32 %v436, %v437
  %v439 = vrot.slane %v438, 2
  %v440 = vadd.f32 %v438, %v439
  %v441 = vrot.slane %v440, 1
  %v442 = vadd.f32 %v440, %v441
  %443 = vst [vmem:[%s4] sm:$0x1] %v442
  %v444 = vmul.f32 %v410, %v410
  %v445 = vmul.f32 %v411, %v411
  %v446 = vmul.f32 %v412, %v412
  %v447 = vmul.f32 %v413, %v413
  %v448 = vadd.f32 %v444, %v445
  %v449 = vadd.f32 %v448, %v446
  %v450 = vadd.f32 %v449, %v447
  %v451 = vrot.slane %v450, 4
  %v452 = vadd.f32 %v450, %v451
  %v453 = vrot.slane %v452, 2
  %v454 = vadd.f32 %v452, %v453
  %v455 = vrot.slane %v454, 1
  %v456 = vadd.f32 %v454, %v455
  %457 = vst [vmem:[%s5] sm:$0x1] %v456
  // Predicated region
  $region14: #{reduction_block_forward.3} parent=0 // pred_check
    _
  $region15: #{reduction_block_forward.3} parent=0 // pred_check_branch
    %459 = sbr.rel (0) target = $region17
  $region16: #{reduction_block_forward.3} parent=0 // pred_region
    _
  $region17: #{reduction_block_forward.3} parent=0 // pred_fallthru
    _
  // Predicated region
  $region18: #{reduction_block_forward.3} parent=0 // pred_check
    _
  $region19: #{reduction_block_forward.3} parent=0 // pred_check_branch
    %461 = sbr.rel (0) target = $region21
  $region20: #{reduction_block_forward.3} parent=0 // pred_region
    _
  $region21: #{reduction_block_forward.3} parent=0 // pred_fallthru
    _
  // Predicated region
  $region22: #{reduction_block_forward.3} parent=0 // pred_check
    _
  $region23: #{reduction_block_forward.3} parent=0 // pred_check_branch
    %463 = sbr.rel (0) target = $region25
  $region24: #{reduction_block_forward.3} parent=0 // pred_region
    _
  $region25: #{reduction_block_forward.3} parent=0 // pred_fallthru
    _
  // Predicated region
  $region26: #{reduction_block_forward.3} parent=0 // pred_check
    _
  $region27: #{reduction_block_forward.3} parent=0 // pred_check_branch
    %465 = sbr.rel (0) target = $region29
  $region28: #{reduction_block_forward.3} parent=0 // pred_region
    _
  $region29: #{reduction_block_forward.3} parent=0 // pred_fallthru
    _
  // Predicated region
  $region30: #{reduction_block_forward.3} parent=0 // pred_check
    _
  $region31: #{reduction_block_forward.3} parent=0 // pred_check_branch
    %467 = sbr.rel (0) target = $region33
  $region32: #{reduction_block_forward.3} parent=0 // pred_region
    _
  $region33: #{reduction_block_forward.3} parent=0 // pred_fallthru
    _
  // Predicated region
  $region34: #{reduction_block_forward.3} parent=0 // pred_check
    _
  $region35: #{reduction_block_forward.3} parent=0 // pred_check_branch
    %469 = sbr.rel (0) target = $region37
  $region36: #{reduction_block_forward.3} parent=0 // pred_region
    _
  $region37: #{reduction_block_forward.3} parent=0 // pred_fallthru
    _

// kernel: tile.48
$region0: #{tile.48}
  #allocation0 [shape = 's32[1]{0}', space=sflag, size = 0x4, scoped, tag = 'scoped memory for tile.48']
  %s0 = inlined_call_operand.vmem [shape: f32[16], index: 0, kind: input, shape index: {}]
  %s1 = inlined_call_operand.vmem [shape: f32[16,16], index: 1, kind: output, shape index: {}]
  // Predicated region
  $region2: #{tile.48} parent=0 // pred_check
    _
  $region3: #{tile.48} parent=0 // pred_check_branch
    %3 = sbr.rel (0) target = $region5
  $region4: #{tile.48} parent=0 // pred_region
    _
  $region5: #{tile.48} parent=0 // pred_fallthru
    _
  %v4 = vld [vmem:[%s0] ss:$0 sm:$0xff]
  %5 = vst [vmem:[%s1] sm:$0xff] %v4
  %s6 = scalar_lea.vmem %s1, 8
  %7 = vst [vmem:[%s6] sm:$0xff] %v4

// kernel: tile.49
$region0: #{tile.49}
  %s0 = inlined_call_operand.vmem [shape: f32[16,16], index: 0, kind: input, shape index: {}]
  %s1 = inlined_call_operand.vmem [shape: f32[1,256], index: 1, kind: output, shape index: {}]
  $region1: #{tile.49} parent=0
    #allocation0 [shape = 'u8[8192]{0}', space=vmem, size = 0x2000, scoped, tag = 'scoped mem for output reshape']
    %s2 = smov 3
    %v3 = vld [vmem:[%s0] ss:$8 sm:%s2]
    %vm4 = vcmask 130048
    %5 = vst.msk [vmem:[#allocation0] ss:$8 sm:$0x3] %vm4, %v3
    %s6 = scalar_lea.vmem %s0, 7
    %s7 = smov 3
    %v8 = vld [vmem:[%s6] ss:$8 sm:%s7]
    %9 = vrot.lane.b32.xlu0 %v8, 112
    %v10 = vpop.permute.xlu0 %9
    %vm11 = vcmask 1048448
    %12 = vst.msk [vmem:[#allocation0] ss:$8 sm:$0x3] %vm11, %v10
    %s13 = scalar_lea.vmem %s0, 6
    %s14 = smov 3
    %v15 = vld [vmem:[%s13] ss:$8 sm:%s14]
    %16 = vrot.lane.b32.xlu0 %v15, 96
    %v17 = vpop.permute.xlu0 %16
    %vm18 = vcmask 917248
    %19 = vst.msk [vmem:[#allocation0] ss:$8 sm:$0x3] %vm18, %v17
    %s20 = scalar_lea.vmem %s0, 5
    %s21 = smov 3
    %v22 = vld [vmem:[%s20] ss:$8 sm:%s21]
    %23 = vrot.lane.b32.xlu0 %v22, 80
    %v24 = vpop.permute.xlu0 %23
    %vm25 = vcmask 786048
    %26 = vst.msk [vmem:[#allocation0] ss:$8 sm:$0x3] %vm25, %v24
    %s27 = scalar_lea.vmem %s0, 4
    %s28 = smov 3
    %v29 = vld [vmem:[%s27] ss:$8 sm:%s28]
    %30 = vrot.lane.b32.xlu0 %v29, 64
    %v31 = vpop.permute.xlu0 %30
    %vm32 = vcmask 654848
    %33 = vst.msk [vmem:[#allocation0] ss:$8 sm:$0x3] %vm32, %v31
    %s34 = scalar_lea.vmem %s0, 3
    %s35 = smov 3
    %v36 = vld [vmem:[%s34] ss:$8 sm:%s35]
    %37 = vrot.lane.b32.xlu0 %v36, 48
    %v38 = vpop.permute.xlu0 %37
    %vm39 = vcmask 523648
    %40 = vst.msk [vmem:[#allocation0] ss:$8 sm:$0x3] %vm39, %v38
    %s41 = scalar_lea.vmem %s0, 2
    %s42 = smov 3
    %v43 = vld [vmem:[%s41] ss:$8 sm:%s42]
    %44 = vrot.lane.b32.xlu0 %v43, 32
    %v45 = vpop.permute.xlu0 %44
    %vm46 = vcmask 392448
    %47 = vst.msk [vmem:[#allocation0] ss:$8 sm:$0x3] %vm46, %v45
    %s48 = scalar_lea.vmem %s0, 1
    %s49 = smov 3
    %v50 = vld [vmem:[%s48] ss:$8 sm:%s49]
    %51 = vrot.lane.b32.xlu0 %v50, 16
    %v52 = vpop.permute.xlu0 %51
    %vm53 = vcmask 261248
    %54 = vst.msk [vmem:[#allocation0] ss:$8 sm:$0x3] %vm53, %v52
    %s56 = sshllo.u32 0, 1
    %v58 = vld [vmem:[#allocation0] sm:%s56]
    %s59 = sshllo.u32 0, 1
    %60 = vst [vmem:[%s1] sm:%s59] %v58
    %s61 = scalar_lea.vmem [#allocation0], 8
    %v62 = vld [vmem:[%s61] sm:%s56]
    %s63 = sshllo.u32 0, 1
    %s64 = scalar_lea.vmem %s1, 1
    %65 = vst [vmem:[%s64] sm:%s63] %v62

// kernel: reduction_block_forward.4
$region0: #{reduction_block_forward.4}
  #allocation0 [shape = 'u32[]', space=smem, size = 0x4, offset = 0x4, fixed_abs, tag = 'smem constant byte address 0x4 - core index']
  #allocation1 [shape = 'u32[144,128]{1,0:T(1,128)}', space=vmem, size = 0x12000, scoped, tag = 'internal scratch']
  %s0 = inlined_call_operand.vmem [shape: bf16[32,128], index: 0, kind: input, shape index: {}]
  %s1 = inlined_call_operand.vmem [shape: f32[1,128], index: 1, kind: input, shape index: {}]
  %s2 = inlined_call_operand.vmem [shape: f32[1,128], index: 2, kind: input, shape index: {}]
  %s3 = inlined_call_operand.vmem [shape: bf16[3,128,256], index: 3, kind: input, shape index: {}]
  %s4 = inlined_call_operand.vmem [shape: f32[1,256], index: 4, kind: input, shape index: {}]
  %s5 = inlined_call_operand.vmem [shape: bf16[32,256], index: 5, kind: output, shape index: {0}]
  %s6 = inlined_call_operand.vmem [shape: f32[1,1,256], index: 6, kind: output, shape index: {1}]
  %s7 = inlined_call_operand.vmem [shape: f32[1,1,256], index: 7, kind: output, shape index: {2}]
  %8 = xla_tuple %s5, %s6, %s7
  %s9 = sld [smem:[#allocation0]]
  $region46: #{reduction_block_forward.4} parent=0
    _
  %s11 = ssub.s32 1, %s9
  %s12 = scalar_select 0, %s11, %s9
  // Predicated region
  $region2: #{reduction_block_forward.4} parent=0 // pred_check
    _
  $region3: #{reduction_block_forward.4} parent=0 // pred_check_branch
    %14 = sbr.rel (0) target = $region5
  $region4: #{reduction_block_forward.4} parent=0 // pred_region
    _
  $region5: #{reduction_block_forward.4} parent=0 // pred_fallthru
    _
  // Predicated region
  $region6: #{reduction_block_forward.4} parent=0 // pred_check
    _
  $region7: #{reduction_block_forward.4} parent=0 // pred_check_branch
    %16 = sbr.rel (0) target = $region9
  $region8: #{reduction_block_forward.4} parent=0 // pred_region
    _
  $region9: #{reduction_block_forward.4} parent=0 // pred_fallthru
    _
  // Predicated region
  $region10: #{reduction_block_forward.4} parent=0 // pred_check
    _
  $region11: #{reduction_block_forward.4} parent=0 // pred_check_branch
    %18 = sbr.rel (0) target = $region13
  $region12: #{reduction_block_forward.4} parent=0 // pred_region
    _
  $region13: #{reduction_block_forward.4} parent=0 // pred_fallthru
    _
  // Predicated region
  $region14: #{reduction_block_forward.4} parent=0 // pred_check
    _
  $region15: #{reduction_block_forward.4} parent=0 // pred_check_branch
    %20 = sbr.rel (0) target = $region17
  $region16: #{reduction_block_forward.4} parent=0 // pred_region
    _
  $region17: #{reduction_block_forward.4} parent=0 // pred_fallthru
    _
  // Predicated region
  $region18: #{reduction_block_forward.4} parent=0 // pred_check
    _
  $region19: #{reduction_block_forward.4} parent=0 // pred_check_branch
    %22 = sbr.rel (0) target = $region21
  $region20: #{reduction_block_forward.4} parent=0 // pred_region
    _
  $region21: #{reduction_block_forward.4} parent=0 // pred_fallthru
    _
  %v24 = vld [vmem:[%s0] sm:$0xf]
  %v25 = vld [vmem:[%s0 + $0x4] sm:$0xf]
  %v26 = vld [vmem:[%s0 + $0x8] sm:$0xf]
  %v27 = vld [vmem:[%s0 + $0xc] sm:$0xf]
  %v28 = vunpack.c.l.bf16 %v24
  %v29 = vunpack.c.l.bf16 %v25
  %v30 = vunpack.c.l.bf16 %v26
  %v31 = vunpack.c.l.bf16 %v27
  %v32 = vld [vmem:[%s1] sm:$0x1]
  %v34 = vlaneseq
  %v35 = vshrl.u32 %v34, 7
  %v36 = vsub.s32 0, %v35
  %v37 = vrot.slane %v32, %v36
  %v39 = vmul.f32 %v28, %v37
  %v40 = vmul.f32 %v29, %v37
  %v41 = vmul.f32 %v30, %v37
  %v42 = vmul.f32 %v31, %v37
  %v43 = vld [vmem:[%s2] sm:$0x1]
  %v45 = vlaneseq
  %v46 = vshrl.u32 %v45, 7
  %v47 = vsub.s32 0, %v46
  %v48 = vrot.slane %v43, %v47
  %v50 = vadd.f32 %v39, %v48
  %v51 = vadd.f32 %v40, %v48
  %v52 = vadd.f32 %v41, %v48
  %v53 = vadd.f32 %v42, %v48
  %v54 = vmax.f32 %v50, 0.0
  %v55 = vmax.f32 %v51, 0.0
  %v56 = vmax.f32 %v52, 0.0
  %v57 = vmax.f32 %v53, 0.0
  %v58 = vlaneseq
  %v59 = vshrl.u32 %v58, 7
  %v60 = vadd.s32 %v59, 8
  %v61 = vadd.s32 %v59, 16
  %v62 = vadd.s32 %v59, 24
  %vm63 = vcmp.lt.s32.totalorder %v59, 0
  %v64 = vsub.s32 0, %v59
  %v65 = vsel %vm63, %v64, %v59
  %v66 = vshrl.u32 %v65, 4
  %v67 = vand.u32 %v65, 15
  %v68 = vsub.s32 0, %v67
  %v69 = vsel %vm63, %v68, %v67
  %vm70 = vcmp.lt.s32.totalorder %v60, 0
  %v71 = vsub.s32 0, %v60
  %v72 = vsel %vm70, %v71, %v60
  %v73 = vshrl.u32 %v72, 4
  %v74 = vand.u32 %v72, 15
  %v75 = vsub.s32 0, %v74
  %v76 = vsel %vm70, %v75, %v74
  %vm77 = vcmp.lt.s32.totalorder %v61, 0
  %v78 = vsub.s32 0, %v61
  %v79 = vsel %vm77, %v78, %v61
  %v80 = vshrl.u32 %v79, 4
  %v81 = vand.u32 %v79, 15
  %v82 = vsub.s32 0, %v81
  %v83 = vsel %vm77, %v82, %v81
  %vm84 = vcmp.lt.s32.totalorder %v62, 0
  %v85 = vsub.s32 0, %v62
  %v86 = vsel %vm84, %v85, %v62
  %v87 = vshrl.u32 %v86, 4
  %v88 = vand.u32 %v86, 15
  %v89 = vsub.s32 0, %v88
  %v90 = vsel %vm84, %v89, %v88
  %vm91 = vcmp.ne.s32.totalorder %v69, 0
  %vm92 = vcmp.ne.s32.totalorder %v76, 0
  %vm93 = vcmp.ne.s32.totalorder %v83, 0
  %vm94 = vcmp.ne.s32.totalorder %v90, 0
  %vm95 = vcmp.lt.s32.totalorder %v69, 0
  %vm96 = vcmp.lt.s32.totalorder %v76, 0
  %vm97 = vcmp.lt.s32.totalorder %v83, 0
  %vm98 = vcmp.lt.s32.totalorder %v90, 0
  %vm99 = vmand %vm95, %vm91
  %vm100 = vmand %vm96, %vm92
  %vm101 = vmand %vm97, %vm93
  %vm102 = vmand %vm98, %vm94
  %v103 = vadd.s32 %v69, 16
  %v104 = vadd.s32 %v76, 16
  %v105 = vadd.s32 %v83, 16
  %v106 = vadd.s32 %v90, 16
  %v107 = vsel %vm99, %v103, %v69
  %v108 = vsel %vm100, %v104, %v76
  %v109 = vsel %vm101, %v105, %v83
  %v110 = vsel %vm102, %v106, %v90
  %vm111 = vcmp.ge.s32.totalorder %v107, 1
  %vm112 = vcmp.ge.s32.totalorder %v108, 1
  %vm113 = vcmp.ge.s32.totalorder %v109, 1
  %vm114 = vcmp.ge.s32.totalorder %v110, 1
  %v115 = vrot.slane %v54, 7
  %v116 = vrot.slane %v55, 7
  %v117 = vrot.slane %v56, 7
  %v118 = vrot.slane %v57, 7
  %vm119 = vcmp.lt.s32.totalorder %v59, 1
  %v120 = vsel %vm119, %v117, %v118
  %v121 = vsel %vm119, %v116, %v117
  %v122 = vsel %vm119, %v115, %v116
  %v123 = vsel %vm119, %v118, %v115
  %v124 = vsel %vm111, 1, 0
  %v125 = vsel %vm112, 1, 0
  %v126 = vsel %vm113, 1, 0
  %v127 = vsel %vm114, 1, 0
  %vm128 = vcmp.eq.s32.totalorder %v124, 1
  %vm129 = vcmp.eq.s32.totalorder %v125, 1
  %vm130 = vcmp.eq.s32.totalorder %v126, 1
  %vm131 = vcmp.eq.s32.totalorder %v127, 1
  %v132 = vsel %vm128, %v123, 0.0
  %v133 = vsel %vm129, %v122, 0.0
  %v134 = vsel %vm130, %v121, 0.0
  %v135 = vsel %vm131, %v120, 0.0
  %vm136 = vcmp.le.s32.totalorder %v107, 14
  %vm137 = vcmp.le.s32.totalorder %v108, 14
  %vm138 = vcmp.le.s32.totalorder %v109, 14
  %vm139 = vcmp.le.s32.totalorder %v110, 14
  %v140 = vrot.slane %v54, 1
  %v141 = vrot.slane %v55, 1
  %v142 = vrot.slane %v56, 1
  %v143 = vrot.slane %v57, 1
  %vm144 = vcmp.lt.s32.totalorder %v59, 7
  %v145 = vsel %vm144, %v142, %v143
  %v146 = vsel %vm144, %v141, %v142
  %v147 = vsel %vm144, %v140, %v141
  %v148 = vsel %vm144, %v143, %v140
  %v149 = vsel %vm136, 1, 0
  %v150 = vsel %vm137, 1, 0
  %v151 = vsel %vm138, 1, 0
  %v152 = vsel %vm139, 1, 0
  %vm153 = vcmp.eq.s32.totalorder %v149, 1
  %vm154 = vcmp.eq.s32.totalorder %v150, 1
  %vm155 = vcmp.eq.s32.totalorder %v151, 1
  %vm156 = vcmp.eq.s32.totalorder %v152, 1
  %v157 = vsel %vm153, %v147, 0.0
  %v158 = vsel %vm154, %v146, 0.0
  %v159 = vsel %vm155, %v145, 0.0
  %v160 = vsel %vm156, %v148, 0.0
  %v161 = vpack.c.bf16 %v133, %v132
  %v162 = vpack.c.bf16 %v135, %v134
  %v163 = vld [vmem:[%s3] sm:$0xff]
  %v164 = vld [vmem:[%s3 + $0x8] sm:$0xff]
  %v165 = vld [vmem:[%s3 + $0x10] sm:$0xff]
  %v166 = vld [vmem:[%s3 + $0x18] sm:$0xff]
  %v167 = vld [vmem:[%s3 + $0x20] sm:$0xff]
  %v168 = vld [vmem:[%s3 + $0x28] sm:$0xff]
  %v169 = vld [vmem:[%s3 + $0x30] sm:$0xff]
  %v170 = vld [vmem:[%s3 + $0x38] sm:$0xff]
  %v171 = vld [vmem:[%s3 + $0x40] sm:$0xff]
  %v172 = vld [vmem:[%s3 + $0x48] sm:$0xff]
  %v173 = vld [vmem:[%s3 + $0x50] sm:$0xff]
  %v174 = vld [vmem:[%s3 + $0x58] sm:$0xff]
  %v175 = vld [vmem:[%s3 + $0x60] sm:$0xff]
  %v176 = vld [vmem:[%s3 + $0x68] sm:$0xff]
  %v177 = vld [vmem:[%s3 + $0x70] sm:$0xff]
  %v178 = vld [vmem:[%s3 + $0x78] sm:$0xff]
  %v179 = vpack.c.bf16 %v55, %v54
  %v180 = vpack.c.bf16 %v57, %v56
  %s181 = scalar_lea.vmem %s3, 128
  %v182 = vld [vmem:[%s181] sm:$0xff]
  %v183 = vld [vmem:[%s181 + $0x8] sm:$0xff]
  %v184 = vld [vmem:[%s181 + $0x10] sm:$0xff]
  %v185 = vld [vmem:[%s181 + $0x18] sm:$0xff]
  %v186 = vld [vmem:[%s181 + $0x20] sm:$0xff]
  %v187 = vld [vmem:[%s181 + $0x28] sm:$0xff]
  %v188 = vld [vmem:[%s181 + $0x30] sm:$0xff]
  %v189 = vld [vmem:[%s181 + $0x38] sm:$0xff]
  %v190 = vld [vmem:[%s181 + $0x40] sm:$0xff]
  %v191 = vld [vmem:[%s181 + $0x48] sm:$0xff]
  %v192 = vld [vmem:[%s181 + $0x50] sm:$0xff]
  %v193 = vld [vmem:[%s181 + $0x58] sm:$0xff]
  %v194 = vld [vmem:[%s181 + $0x60] sm:$0xff]
  %v195 = vld [vmem:[%s181 + $0x68] sm:$0xff]
  %v196 = vld [vmem:[%s181 + $0x70] sm:$0xff]
  %v197 = vld [vmem:[%s181 + $0x78] sm:$0xff]
  %v214 = vunpack.c.l.b16 %v182
  %v215 = vunpack.c.h.b16 %v182
  %v216 = vunpack.c.l.b16 %v183
  %v217 = vunpack.c.h.b16 %v183
  %v218 = vunpack.c.l.b16 %v184
  %v219 = vunpack.c.h.b16 %v184
  %v220 = vunpack.c.l.b16 %v185
  %v221 = vunpack.c.h.b16 %v185
  %v222 = vunpack.c.l.b16 %v186
  %v223 = vunpack.c.h.b16 %v186
  %v224 = vunpack.c.l.b16 %v187
  %v225 = vunpack.c.h.b16 %v187
  %v226 = vunpack.c.l.b16 %v188
  %v227 = vunpack.c.h.b16 %v188
  %v228 = vunpack.c.l.b16 %v189
  %v229 = vunpack.c.h.b16 %v189
  %v230 = vunpack.c.l.b16 %v190
  %v231 = vunpack.c.h.b16 %v190
  %v232 = vunpack.c.l.b16 %v191
  %v233 = vunpack.c.h.b16 %v191
  %v234 = vunpack.c.l.b16 %v192
  %v235 = vunpack.c.h.b16 %v192
  %v236 = vunpack.c.l.b16 %v193
  %v237 = vunpack.c.h.b16 %v193
  %v238 = vunpack.c.l.b16 %v194
  %v239 = vunpack.c.h.b16 %v194
  %v240 = vunpack.c.l.b16 %v195
  %v241 = vunpack.c.h.b16 %v195
  %v242 = vunpack.c.l.b16 %v196
  %v243 = vunpack.c.h.b16 %v196
  %v244 = vunpack.c.l.b16 %v197
  %v245 = vunpack.c.h.b16 %v197
  %v246 = vpack.c.b16 %v216, %v214
  %v247 = vpack.c.b16 %v217, %v215
  %v248 = vpack.c.b16 %v220, %v218
  %v249 = vpack.c.b16 %v221, %v219
  %v250 = vpack.c.b16 %v224, %v222
  %v251 = vpack.c.b16 %v225, %v223
  %v252 = vpack.c.b16 %v228, %v226
  %v253 = vpack.c.b16 %v229, %v227
  %v254 = vpack.c.b16 %v232, %v230
  %v255 = vpack.c.b16 %v233, %v231
  %v256 = vpack.c.b16 %v236, %v234
  %v257 = vpack.c.b16 %v237, %v235
  %v258 = vpack.c.b16 %v240, %v238
  %v259 = vpack.c.b16 %v241, %v239
  %v260 = vpack.c.b16 %v244, %v242
  %v261 = vpack.c.b16 %v245, %v243
  %278 = vmatprep.subr.bf16.mxu0 %v247
  %279 = vmatpush1.bf16.msra.mxu0 %v246
  %280 = vmatprep.subr.bf16.mxu0 %v249
  %281 = vmatpush1.bf16.msra.mxu0 %v248
  %282 = vmatprep.subr.bf16.mxu0 %v251
  %283 = vmatpush1.bf16.msra.mxu0 %v250
  %284 = vmatprep.subr.bf16.mxu0 %v253
  %285 = vmatpush1.bf16.msra.mxu0 %v252
  %286 = vmatprep.subr.bf16.mxu0 %v255
  %287 = vmatpush1.bf16.msra.mxu0 %v254
  %288 = vmatprep.subr.bf16.mxu0 %v257
  %289 = vmatpush1.bf16.msra.mxu0 %v256
  %290 = vmatprep.subr.bf16.mxu0 %v259
  %291 = vmatpush1.bf16.msra.mxu0 %v258
  %292 = vmatprep.subr.bf16.mxu0 %v261
  %293 = vmatpush1.bf16.msra.mxu0 %v260
  %294 = vmatprep.subr.bf16.mxu0 0
  %295 = vmatpush1.bf16.msra.mxu0 0
  %296 = vmatprep.subr.bf16.mxu0 0
  %297 = vmatpush1.bf16.msra.mxu0 0
  %298 = vmatprep.subr.bf16.mxu0 0
  %299 = vmatpush1.bf16.msra.mxu0 0
  %300 = vmatprep.subr.bf16.mxu0 0
  %301 = vmatpush1.bf16.msra.mxu0 0
  %302 = vmatprep.subr.bf16.mxu0 0
  %303 = vmatpush1.bf16.msra.mxu0 0
  %304 = vmatprep.subr.bf16.mxu0 0
  %305 = vmatpush1.bf16.msra.mxu0 0
  %306 = vmatprep.subr.bf16.mxu0 0
  %307 = vmatpush1.bf16.msra.mxu0 0
  %308 = vmatprep.subr.bf16.mxu0 0
  %309 = vmatpush1.bf16.msra.mxu0 0
  %310 = vmatprep.mubr.bf16.mxu0 0
  %311 = vmatmul.mubr.bf16.gmra.mrb[0].mxu0 %v179
  %v312 = vpop.f32.mrb[0].mxu0
  %v313 = vadd.f32 0.0, %v312
  %v314 = vpop.f32.mrb[0].mxu0
  %v315 = vadd.f32 0.0, %v314
  %v316 = vpop.f32.mrb[0].mxu0
  %v317 = vadd.f32 0.0, %v316
  %v318 = vpop.f32.mrb[0].mxu0
  %v319 = vadd.f32 0.0, %v318
  %320 = vmatprep.mubr.bf16.mxu0 0
  %321 = vmatmul.mubr.bf16.gmra.mrb[0].mxu0 %v180
  %v322 = vpop.f32.mrb[0].mxu0
  %v323 = vadd.f32 0.0, %v322
  %v324 = vpop.f32.mrb[0].mxu0
  %v325 = vadd.f32 0.0, %v324
  %v326 = vpop.f32.mrb[0].mxu0
  %v327 = vadd.f32 0.0, %v326
  %v328 = vpop.f32.mrb[0].mxu0
  %v329 = vadd.f32 0.0, %v328
  %330 = vdwg.mxu0
  %v347 = vunpack.c.l.b16 %v163
  %v348 = vunpack.c.h.b16 %v163
  %v349 = vunpack.c.l.b16 %v164
  %v350 = vunpack.c.h.b16 %v164
  %v351 = vunpack.c.l.b16 %v165
  %v352 = vunpack.c.h.b16 %v165
  %v353 = vunpack.c.l.b16 %v166
  %v354 = vunpack.c.h.b16 %v166
  %v355 = vunpack.c.l.b16 %v167
  %v356 = vunpack.c.h.b16 %v167
  %v357 = vunpack.c.l.b16 %v168
  %v358 = vunpack.c.h.b16 %v168
  %v359 = vunpack.c.l.b16 %v169
  %v360 = vunpack.c.h.b16 %v169
  %v361 = vunpack.c.l.b16 %v170
  %v362 = vunpack.c.h.b16 %v170
  %v363 = vunpack.c.l.b16 %v171
  %v364 = vunpack.c.h.b16 %v171
  %v365 = vunpack.c.l.b16 %v172
  %v366 = vunpack.c.h.b16 %v172
  %v367 = vunpack.c.l.b16 %v173
  %v368 = vunpack.c.h.b16 %v173
  %v369 = vunpack.c.l.b16 %v174
  %v370 = vunpack.c.h.b16 %v174
  %v371 = vunpack.c.l.b16 %v175
  %v372 = vunpack.c.h.b16 %v175
  %v373 = vunpack.c.l.b16 %v176
  %v374 = vunpack.c.h.b16 %v176
  %v375 = vunpack.c.l.b16 %v177
  %v376 = vunpack.c.h.b16 %v177
  %v377 = vunpack.c.l.b16 %v178
  %v378 = vunpack.c.h.b16 %v178
  %v379 = vpack.c.b16 %v349, %v347
  %v380 = vpack.c.b16 %v350, %v348
  %v381 = vpack.c.b16 %v353, %v351
  %v382 = vpack.c.b16 %v354, %v352
  %v383 = vpack.c.b16 %v357, %v355
  %v384 = vpack.c.b16 %v358, %v356
  %v385 = vpack.c.b16 %v361, %v359
  %v386 = vpack.c.b16 %v362, %v360
  %v387 = vpack.c.b16 %v365, %v363
  %v388 = vpack.c.b16 %v366, %v364
  %v389 = vpack.c.b16 %v369, %v367
  %v390 = vpack.c.b16 %v370, %v368
  %v391 = vpack.c.b16 %v373, %v371
  %v392 = vpack.c.b16 %v374, %v372
  %v393 = vpack.c.b16 %v377, %v375
  %v394 = vpack.c.b16 %v378, %v376
  %411 = vmatprep.subr.bf16.mxu0 %v380
  %412 = vmatpush1.bf16.msra.mxu0 %v379
  %413 = vmatprep.subr.bf16.mxu0 %v382
  %414 = vmatpush1.bf16.msra.mxu0 %v381
  %415 = vmatprep.subr.bf16.mxu0 %v384
  %416 = vmatpush1.bf16.msra.mxu0 %v383
  %417 = vmatprep.subr.bf16.mxu0 %v386
  %418 = vmatpush1.bf16.msra.mxu0 %v385
  %419 = vmatprep.subr.bf16.mxu0 %v388
  %420 = vmatpush1.bf16.msra.mxu0 %v387
  %421 = vmatprep.subr.bf16.mxu0 %v390
  %422 = vmatpush1.bf16.msra.mxu0 %v389
  %423 = vmatprep.subr.bf16.mxu0 %v392
  %424 = vmatpush1.bf16.msra.mxu0 %v391
  %425 = vmatprep.subr.bf16.mxu0 %v394
  %426 = vmatpush1.bf16.msra.mxu0 %v393
  %427 = vmatprep.subr.bf16.mxu0 0
  %428 = vmatpush1.bf16.msra.mxu0 0
  %429 = vmatprep.subr.bf16.mxu0 0
  %430 = vmatpush1.bf16.msra.mxu0 0
  %431 = vmatprep.subr.bf16.mxu0 0
  %432 = vmatpush1.bf16.msra.mxu0 0
  %433 = vmatprep.subr.bf16.mxu0 0
  %434 = vmatpush1.bf16.msra.mxu0 0
  %435 = vmatprep.subr.bf16.mxu0 0
  %436 = vmatpush1.bf16.msra.mxu0 0
  %437 = vmatprep.subr.bf16.mxu0 0
  %438 = vmatpush1.bf16.msra.mxu0 0
  %439 = vmatprep.subr.bf16.mxu0 0
  %440 = vmatpush1.bf16.msra.mxu0 0
  %441 = vmatprep.subr.bf16.mxu0 0
  %442 = vmatpush1.bf16.msra.mxu0 0
  %443 = vmatprep.mubr.bf16.mxu0 0
  %444 = vmatmul.mubr.bf16.gmra.mrb[0].mxu0 %v161
  %v445 = vpop.f32.mrb[0].mxu0
  %v446 = vadd.f32 %v313, %v445
  %v447 = vpop.f32.mrb[0].mxu0
  %v448 = vadd.f32 %v315, %v447
  %v449 = vpop.f32.mrb[0].mxu0
  %v450 = vadd.f32 %v317, %v449
  %v451 = vpop.f32.mrb[0].mxu0
  %v452 = vadd.f32 %v319, %v451
  %453 = vmatprep.mubr.bf16.mxu0 0
  %454 = vmatmul.mubr.bf16.gmra.mrb[0].mxu0 %v162
  %v455 = vpop.f32.mrb[0].mxu0
  %v456 = vadd.f32 %v323, %v455
  %v457 = vpop.f32.mrb[0].mxu0
  %v458 = vadd.f32 %v325, %v457
  %v459 = vpop.f32.mrb[0].mxu0
  %v460 = vadd.f32 %v327, %v459
  %v461 = vpop.f32.mrb[0].mxu0
  %v462 = vadd.f32 %v329, %v461
  %463 = vdwg.mxu0
  %v464 = vpack.c.bf16 %v158, %v157
  %v465 = vpack.c.bf16 %v160, %v159
  %s466 = scalar_lea.vmem %s3, 256
  %v467 = vld [vmem:[%s466] sm:$0xff]
  %v468 = vld [vmem:[%s466 + $0x8] sm:$0xff]
  %v469 = vld [vmem:[%s466 + $0x10] sm:$0xff]
  %v470 = vld [vmem:[%s466 + $0x18] sm:$0xff]
  %v471 = vld [vmem:[%s466 + $0x20] sm:$0xff]
  %v472 = vld [vmem:[%s466 + $0x28] sm:$0xff]
  %v473 = vld [vmem:[%s466 + $0x30] sm:$0xff]
  %v474 = vld [vmem:[%s466 + $0x38] sm:$0xff]
  %v475 = vld [vmem:[%s466 + $0x40] sm:$0xff]
  %v476 = vld [vmem:[%s466 + $0x48] sm:$0xff]
  %v477 = vld [vmem:[%s466 + $0x50] sm:$0xff]
  %v478 = vld [vmem:[%s466 + $0x58] sm:$0xff]
  %v479 = vld [vmem:[%s466 + $0x60] sm:$0xff]
  %v480 = vld [vmem:[%s466 + $0x68] sm:$0xff]
  %v481 = vld [vmem:[%s466 + $0x70] sm:$0xff]
  %v482 = vld [vmem:[%s466 + $0x78] sm:$0xff]
  %v499 = vunpack.c.l.b16 %v467
  %v500 = vunpack.c.h.b16 %v467
  %v501 = vunpack.c.l.b16 %v468
  %v502 = vunpack.c.h.b16 %v468
  %v503 = vunpack.c.l.b16 %v469
  %v504 = vunpack.c.h.b16 %v469
  %v505 = vunpack.c.l.b16 %v470
  %v506 = vunpack.c.h.b16 %v470
  %v507 = vunpack.c.l.b16 %v471
  %v508 = vunpack.c.h.b16 %v471
  %v509 = vunpack.c.l.b16 %v472
  %v510 = vunpack.c.h.b16 %v472
  %v511 = vunpack.c.l.b16 %v473
  %v512 = vunpack.c.h.b16 %v473
  %v513 = vunpack.c.l.b16 %v474
  %v514 = vunpack.c.h.b16 %v474
  %v515 = vunpack.c.l.b16 %v475
  %v516 = vunpack.c.h.b16 %v475
  %v517 = vunpack.c.l.b16 %v476
  %v518 = vunpack.c.h.b16 %v476
  %v519 = vunpack.c.l.b16 %v477
  %v520 = vunpack.c.h.b16 %v477
  %v521 = vunpack.c.l.b16 %v478
  %v522 = vunpack.c.h.b16 %v478
  %v523 = vunpack.c.l.b16 %v479
  %v524 = vunpack.c.h.b16 %v479
  %v525 = vunpack.c.l.b16 %v480
  %v526 = vunpack.c.h.b16 %v480
  %v527 = vunpack.c.l.b16 %v481
  %v528 = vunpack.c.h.b16 %v481
  %v529 = vunpack.c.l.b16 %v482
  %v530 = vunpack.c.h.b16 %v482
  %v531 = vpack.c.b16 %v501, %v499
  %v532 = vpack.c.b16 %v502, %v500
  %v533 = vpack.c.b16 %v505, %v503
  %v534 = vpack.c.b16 %v506, %v504
  %v535 = vpack.c.b16 %v509, %v507
  %v536 = vpack.c.b16 %v510, %v508
  %v537 = vpack.c.b16 %v513, %v511
  %v538 = vpack.c.b16 %v514, %v512
  %v539 = vpack.c.b16 %v517, %v515
  %v540 = vpack.c.b16 %v518, %v516
  %v541 = vpack.c.b16 %v521, %v519
  %v542 = vpack.c.b16 %v522, %v520
  %v543 = vpack.c.b16 %v525, %v523
  %v544 = vpack.c.b16 %v526, %v524
  %v545 = vpack.c.b16 %v529, %v527
  %v546 = vpack.c.b16 %v530, %v528
  %563 = vmatprep.subr.bf16.mxu0 %v532
  %564 = vmatpush1.bf16.msra.mxu0 %v531
  %565 = vmatprep.subr.bf16.mxu0 %v534
  %566 = vmatpush1.bf16.msra.mxu0 %v533
  %567 = vmatprep.subr.bf16.mxu0 %v536
  %568 = vmatpush1.bf16.msra.mxu0 %v535
  %569 = vmatprep.subr.bf16.mxu0 %v538
  %570 = vmatpush1.bf16.msra.mxu0 %v537
  %571 = vmatprep.subr.bf16.mxu0 %v540
  %572 = vmatpush1.bf16.msra.mxu0 %v539
  %573 = vmatprep.subr.bf16.mxu0 %v542
  %574 = vmatpush1.bf16.msra.mxu0 %v541
  %575 = vmatprep.subr.bf16.mxu0 %v544
  %576 = vmatpush1.bf16.msra.mxu0 %v543
  %577 = vmatprep.subr.bf16.mxu0 %v546
  %578 = vmatpush1.bf16.msra.mxu0 %v545
  %579 = vmatprep.subr.bf16.mxu0 0
  %580 = vmatpush1.bf16.msra.mxu0 0
  %581 = vmatprep.subr.bf16.mxu0 0
  %582 = vmatpush1.bf16.msra.mxu0 0
  %583 = vmatprep.subr.bf16.mxu0 0
  %584 = vmatpush1.bf16.msra.mxu0 0
  %585 = vmatprep.subr.bf16.mxu0 0
  %586 = vmatpush1.bf16.msra.mxu0 0
  %587 = vmatprep.subr.bf16.mxu0 0
  %588 = vmatpush1.bf16.msra.mxu0 0
  %589 = vmatprep.subr.bf16.mxu0 0
  %590 = vmatpush1.bf16.msra.mxu0 0
  %591 = vmatprep.subr.bf16.mxu0 0
  %592 = vmatpush1.bf16.msra.mxu0 0
  %593 = vmatprep.subr.bf16.mxu0 0
  %594 = vmatpush1.bf16.msra.mxu0 0
  %595 = vmatprep.mubr.bf16.mxu0 0
  %596 = vmatmul.mubr.bf16.gmra.mrb[0].mxu0 %v464
  %v597 = vpop.f32.mrb[0].mxu0
  %v598 = vadd.f32 0.0, %v597
  %v599 = vpop.f32.mrb[0].mxu0
  %v600 = vadd.f32 0.0, %v599
  %v601 = vpop.f32.mrb[0].mxu0
  %v602 = vadd.f32 0.0, %v601
  %v603 = vpop.f32.mrb[0].mxu0
  %v604 = vadd.f32 0.0, %v603
  %605 = vmatprep.mubr.bf16.mxu0 0
  %606 = vmatmul.mubr.bf16.gmra.mrb[0].mxu0 %v465
  %v607 = vpop.f32.mrb[0].mxu0
  %v608 = vadd.f32 0.0, %v607
  %v609 = vpop.f32.mrb[0].mxu0
  %v610 = vadd.f32 0.0, %v609
  %v611 = vpop.f32.mrb[0].mxu0
  %v612 = vadd.f32 0.0, %v611
  %v613 = vpop.f32.mrb[0].mxu0
  %v614 = vadd.f32 0.0, %v613
  %615 = vdwg.mxu0
  %v616 = vadd.f32 %v446, %v598
  %v617 = vadd.f32 %v448, %v600
  %v618 = vadd.f32 %v450, %v602
  %v619 = vadd.f32 %v452, %v604
  %v620 = vadd.f32 %v456, %v608
  %v621 = vadd.f32 %v458, %v610
  %v622 = vadd.f32 %v460, %v612
  %v623 = vadd.f32 %v462, %v614
  %v624 = vld [vmem:[%s4] sm:$0x3]
  %v626 = vlaneseq
  %v627 = vshrl.u32 %v626, 7
  %v628 = vsub.s32 0, %v627
  %v629 = vrot.slane %v624, %v628
  %v630 = vlaneseq
  %v631 = vshrl.u32 %v630, 7
  %v632 = vsub.s32 1, %v631
  %v633 = vrot.slane %v624, %v632
  %v636 = vadd.f32 %v616, %v629
  %v637 = vadd.f32 %v617, %v633
  %v638 = vadd.f32 %v618, %v629
  %v639 = vadd.f32 %v619, %v633
  %v640 = vadd.f32 %v620, %v629
  %v641 = vadd.f32 %v621, %v633
  %v642 = vadd.f32 %v622, %v629
  %v643 = vadd.f32 %v623, %v633
  %v644 = vmax.f32 %v636, 0.0
  %v645 = vmax.f32 %v637, 0.0
  %v646 = vmax.f32 %v638, 0.0
  %v647 = vmax.f32 %v639, 0.0
  %v648 = vmax.f32 %v640, 0.0
  %v649 = vmax.f32 %v641, 0.0
  %v650 = vmax.f32 %v642, 0.0
  %v651 = vmax.f32 %v643, 0.0
  %v652 = vpack.c.bf16 %v646, %v644
  %v653 = vpack.c.bf16 %v647, %v645
  %v654 = vpack.c.bf16 %v650, %v648
  %v655 = vpack.c.bf16 %v651, %v649
  %v660 = vunpack.c.l.b16 %v652
  %v661 = vunpack.c.l.b16 %v653
  %v662 = vunpack.c.h.b16 %v652
  %v663 = vunpack.c.h.b16 %v653
  %v664 = vunpack.c.l.b16 %v654
  %v665 = vunpack.c.l.b16 %v655
  %v666 = vunpack.c.h.b16 %v654
  %v667 = vunpack.c.h.b16 %v655
  %v668 = vpack.c.b16 %v661, %v660
  %v669 = vpack.c.b16 %v663, %v662
  %v670 = vpack.c.b16 %v665, %v664
  %v671 = vpack.c.b16 %v667, %v666
  %676 = vst [vmem:[%s5] sm:$0xff] %v668
  %677 = vst [vmem:[%s5 + $0x8] sm:$0xff] %v669
  %678 = vst [vmem:[%s5 + $0x10] sm:$0xff] %v670
  %679 = vst [vmem:[%s5 + $0x18] sm:$0xff] %v671
  %v680 = vadd.f32 %v644, %v646
  %v681 = vadd.f32 %v680, %v648
  %v682 = vadd.f32 %v681, %v650
  %v683 = vrot.slane %v682, 4
  %v684 = vadd.f32 %v682, %v683
  %v685 = vrot.slane %v684, 2
  %v686 = vadd.f32 %v684, %v685
  %v687 = vrot.slane %v686, 1
  %v688 = vadd.f32 %v686, %v687
  %v689 = vadd.f32 %v645, %v647
  %v690 = vadd.f32 %v689, %v649
  %v691 = vadd.f32 %v690, %v651
  %v692 = vrot.slane %v691, 4
  %v693 = vadd.f32 %v691, %v692
  %v694 = vrot.slane %v693, 2
  %v695 = vadd.f32 %v693, %v694
  %v696 = vrot.slane %v695, 1
  %v697 = vadd.f32 %v695, %v696
  %v700 = vcombine.low %v688, %v697
  %v702 = vunpack.c.l.s4 1966171168
  %v703 = vunpack.c.0.s8 %v702
  %v704 = vlaneseq
  %v705 = vshrl.u32 %v704, 7
  %v706 = vsub.s32 %v703, %v705
  %v707 = vrot.slane %v700, %v706
  %v709 = vunpack.c.l.s4 1966171168
  %v710 = vunpack.c.0.s8 %v709
  %v711 = vlaneseq
  %v712 = vshrl.u32 %v711, 7
  %v713 = vsub.s32 %v710, %v712
  %v714 = vrot.slane %v707, %v713
  %v716 = vlaneseq
  %vm717 = vcmp.ge.s32.totalorder %v716, 0
  %vm718 = vcmp.lt.s32.totalorder %v716, 256
  %vm719 = vmand %vm717, %vm718
  %720 = vst.msk [vmem:[%s6] sm:$0x3] %vm719, %v714
  %v721 = vmul.f32 %v644, %v644
  %v722 = vmul.f32 %v645, %v645
  %v723 = vmul.f32 %v646, %v646
  %v724 = vmul.f32 %v647, %v647
  %v725 = vmul.f32 %v648, %v648
  %v726 = vmul.f32 %v649, %v649
  %v727 = vmul.f32 %v650, %v650
  %v728 = vmul.f32 %v651, %v651
  %v729 = vadd.f32 %v721, %v723
  %v730 = vadd.f32 %v729, %v725
  %v731 = vadd.f32 %v730, %v727
  %v732 = vrot.slane %v731, 4
  %v733 = vadd.f32 %v731, %v732
  %v734 = vrot.slane %v733, 2
  %v735 = vadd.f32 %v733, %v734
  %v736 = vrot.slane %v735, 1
  %v737 = vadd.f32 %v735, %v736
  %v738 = vadd.f32 %v722, %v724
  %v739 = vadd.f32 %v738, %v726
  %v740 = vadd.f32 %v739, %v728
  %v741 = vrot.slane %v740, 4
  %v742 = vadd.f32 %v740, %v741
  %v743 = vrot.slane %v742, 2
  %v744 = vadd.f32 %v742, %v743
  %v745 = vrot.slane %v744, 1
  %v746 = vadd.f32 %v744, %v745
  %v749 = vcombine.low %v737, %v746
  %v751 = vunpack.c.l.s4 1966171168
  %v752 = vunpack.c.0.s8 %v751
  %v753 = vlaneseq
  %v754 = vshrl.u32 %v753, 7
  %v755 = vsub.s32 %v752, %v754
  %v756 = vrot.slane %v749, %v755
  %v758 = vunpack.c.l.s4 1966171168
  %v759 = vunpack.c.0.s8 %v758
  %v760 = vlaneseq
  %v761 = vshrl.u32 %v760, 7
  %v762 = vsub.s32 %v759, %v761
  %v763 = vrot.slane %v756, %v762
  %765 = vst.msk [vmem:[%s7] sm:$0x3] %vm719, %v763
  // Predicated region
  $region22: #{reduction_block_forward.4} parent=0 // pred_check
    _
  $region23: #{reduction_block_forward.4} parent=0 // pred_check_branch
    %767 = sbr.rel (0) target = $region25
  $region24: #{reduction_block_forward.4} parent=0 // pred_region
    _
  $region25: #{reduction_block_forward.4} parent=0 // pred_fallthru
    _
  // Predicated region
  $region26: #{reduction_block_forward.4} parent=0 // pred_check
    _
  $region27: #{reduction_block_forward.4} parent=0 // pred_check_branch
    %769 = sbr.rel (0) target = $region29
  $region28: #{reduction_block_forward.4} parent=0 // pred_region
    _
  $region29: #{reduction_block_forward.4} parent=0 // pred_fallthru
    _
  // Predicated region
  $region30: #{reduction_block_forward.4} parent=0 // pred_check
    _
  $region31: #{reduction_block_forward.4} parent=0 // pred_check_branch
    %771 = sbr.rel (0) target = $region33
  $region32: #{reduction_block_forward.4} parent=0 // pred_region
    _
  $region33: #{reduction_block_forward.4} parent=0 // pred_fallthru
    _
  // Predicated region
  $region34: #{reduction_block_forward.4} parent=0 // pred_check
    _
  $region35: #{reduction_block_forward.4} parent=0 // pred_check_branch
    %773 = sbr.rel (0) target = $region37
  $region36: #{reduction_block_forward.4} parent=0 // pred_region
    _
  $region37: #{reduction_block_forward.4} parent=0 // pred_fallthru
    _
  // Predicated region
  $region38: #{reduction_block_forward.4} parent=0 // pred_check
    _
  $region39: #{reduction_block_forward.4} parent=0 // pred_check_branch
    %775 = sbr.rel (0) target = $region41
  $region40: #{reduction_block_forward.4} parent=0 // pred_region
    _
  $region41: #{reduction_block_forward.4} parent=0 // pred_fallthru
    _
  // Predicated region
  $region42: #{reduction_block_forward.4} parent=0 // pred_check
    _
  $region43: #{reduction_block_forward.4} parent=0 // pred_check_branch
    %777 = sbr.rel (0) target = $region45
  $region44: #{reduction_block_forward.4} parent=0 // pred_region
    _
  $region45: #{reduction_block_forward.4} parent=0 // pred_fallthru
    _

// kernel: reduction_block_forward.5
$region0: #{reduction_block_forward.5}
  #allocation0 [shape = 'u32[]', space=smem, size = 0x4, offset = 0x4, fixed_abs, tag = 'smem constant byte address 0x4 - core index']
  #allocation1 [shape = 'u32[144,128]{1,0:T(1,128)}', space=vmem, size = 0x12000, scoped, tag = 'internal scratch']
  %s0 = inlined_call_operand.vmem [shape: bf16[32,256], index: 0, kind: input, shape index: {}]
  %s1 = inlined_call_operand.vmem [shape: f32[1,256], index: 1, kind: input, shape index: {}]
  %s2 = inlined_call_operand.vmem [shape: f32[1,256], index: 2, kind: input, shape index: {}]
  %s3 = inlined_call_operand.vmem [shape: f32[256,128], index: 3, kind: input, shape index: {}]
  %s4 = inlined_call_operand.vmem [shape: f32[256,128], index: 4, kind: input, shape index: {}]
  %s5 = inlined_call_operand.vmem [shape: f32[16,32], index: 5, kind: input, shape index: {}]
  %s6 = inlined_call_operand.vmem [shape: f32[16,32], index: 6, kind: input, shape index: {}]
  %s7 = inlined_call_operand.vmem [shape: f32[32,256], index: 7, kind: output, shape index: {0}]
  %s8 = inlined_call_operand.vmem [shape: f32[16,128], index: 8, kind: output, shape index: {1}]
  %9 = xla_tuple %s7, %s8
  %s10 = sld [smem:[#allocation0]]
  $region46: #{reduction_block_forward.5} parent=0
    _
  %s12 = ssub.s32 1, %s10
  %s13 = scalar_select 0, %s12, %s10
  // Predicated region
  $region2: #{reduction_block_forward.5} parent=0 // pred_check
    _
  $region3: #{reduction_block_forward.5} parent=0 // pred_check_branch
    %15 = sbr.rel (0) target = $region5
  $region4: #{reduction_block_forward.5} parent=0 // pred_region
    _
  $region5: #{reduction_block_forward.5} parent=0 // pred_fallthru
    _
  // Predicated region
  $region6: #{reduction_block_forward.5} parent=0 // pred_check
    _
  $region7: #{reduction_block_forward.5} parent=0 // pred_check_branch
    %17 = sbr.rel (0) target = $region9
  $region8: #{reduction_block_forward.5} parent=0 // pred_region
    _
  $region9: #{reduction_block_forward.5} parent=0 // pred_fallthru
    _
  // Predicated region
  $region10: #{reduction_block_forward.5} parent=0 // pred_check
    _
  $region11: #{reduction_block_forward.5} parent=0 // pred_check_branch
    %19 = sbr.rel (0) target = $region13
  $region12: #{reduction_block_forward.5} parent=0 // pred_region
    _
  $region13: #{reduction_block_forward.5} parent=0 // pred_fallthru
    _
  // Predicated region
  $region14: #{reduction_block_forward.5} parent=0 // pred_check
    _
  $region15: #{reduction_block_forward.5} parent=0 // pred_check_branch
    %21 = sbr.rel (0) target = $region17
  $region16: #{reduction_block_forward.5} parent=0 // pred_region
    _
  $region17: #{reduction_block_forward.5} parent=0 // pred_fallthru
    _
  // Predicated region
  $region18: #{reduction_block_forward.5} parent=0 // pred_check
    _
  $region19: #{reduction_block_forward.5} parent=0 // pred_check_branch
    %23 = sbr.rel (0) target = $region21
  $region20: #{reduction_block_forward.5} parent=0 // pred_region
    _
  $region21: #{reduction_block_forward.5} parent=0 // pred_fallthru
    _
  // Predicated region
  $region22: #{reduction_block_forward.5} parent=0 // pred_check
    _
  $region23: #{reduction_block_forward.5} parent=0 // pred_check_branch
    %25 = sbr.rel (0) target = $region25
  $region24: #{reduction_block_forward.5} parent=0 // pred_region
    _
  $region25: #{reduction_block_forward.5} parent=0 // pred_fallthru
    _
  // Predicated region
  $region26: #{reduction_block_forward.5} parent=0 // pred_check
    _
  $region27: #{reduction_block_forward.5} parent=0 // pred_check_branch
    %27 = sbr.rel (0) target = $region29
  $region28: #{reduction_block_forward.5} parent=0 // pred_region
    _
  $region29: #{reduction_block_forward.5} parent=0 // pred_fallthru
    _
  %v28 = vld [vmem:[%s0] sm:$0xff]
  %v29 = vld [vmem:[%s0 + $0x8] sm:$0xff]
  %v30 = vld [vmem:[%s0 + $0x10] sm:$0xff]
  %v31 = vld [vmem:[%s0 + $0x18] sm:$0xff]
  %v32 = vunpack.c.l.bf16 %v28
  %v33 = vunpack.c.h.bf16 %v28
  %v34 = vunpack.c.l.bf16 %v29
  %v35 = vunpack.c.h.bf16 %v29
  %v36 = vunpack.c.l.bf16 %v30
  %v37 = vunpack.c.h.bf16 %v30
  %v38 = vunpack.c.l.bf16 %v31
  %v39 = vunpack.c.h.bf16 %v31
  %v40 = vld [vmem:[%s1] sm:$0x3]
  %v42 = vlaneseq
  %v43 = vshrl.u32 %v42, 7
  %v44 = vsub.s32 0, %v43
  %v45 = vrot.slane %v40, %v44
  %v46 = vlaneseq
  %v47 = vshrl.u32 %v46, 7
  %v48 = vsub.s32 1, %v47
  %v49 = vrot.slane %v40, %v48
  %v52 = vmul.f32 %v32, %v45
  %v53 = vmul.f32 %v33, %v49
  %v54 = vmul.f32 %v34, %v45
  %v55 = vmul.f32 %v35, %v49
  %v56 = vmul.f32 %v36, %v45
  %v57 = vmul.f32 %v37, %v49
  %v58 = vmul.f32 %v38, %v45
  %v59 = vmul.f32 %v39, %v49
  %v60 = vld [vmem:[%s2] sm:$0x3]
  %v62 = vlaneseq
  %v63 = vshrl.u32 %v62, 7
  %v64 = vsub.s32 0, %v63
  %v65 = vrot.slane %v60, %v64
  %v66 = vlaneseq
  %v67 = vshrl.u32 %v66, 7
  %v68 = vsub.s32 1, %v67
  %v69 = vrot.slane %v60, %v68
  %v72 = vadd.f32 %v52, %v65
  %v73 = vadd.f32 %v53, %v69
  %v74 = vadd.f32 %v54, %v65
  %v75 = vadd.f32 %v55, %v69
  %v76 = vadd.f32 %v56, %v65
  %v77 = vadd.f32 %v57, %v69
  %v78 = vadd.f32 %v58, %v65
  %v79 = vadd.f32 %v59, %v69
  %v80 = vmax.f32 %v72, 0.0
  %v81 = vmax.f32 %v73, 0.0
  %v82 = vmax.f32 %v74, 0.0
  %v83 = vmax.f32 %v75, 0.0
  %v84 = vmax.f32 %v76, 0.0
  %v85 = vmax.f32 %v77, 0.0
  %v86 = vmax.f32 %v78, 0.0
  %v87 = vmax.f32 %v79, 0.0
  %88 = vst [vmem:[%s7] sm:$0xff] %v80
  %89 = vst [vmem:[%s7 + $0x8] sm:$0xff] %v81
  %90 = vst [vmem:[%s7 + $0x10] sm:$0xff] %v82
  %91 = vst [vmem:[%s7 + $0x18] sm:$0xff] %v83
  %92 = vst [vmem:[%s7 + $0x20] sm:$0xff] %v84
  %93 = vst [vmem:[%s7 + $0x28] sm:$0xff] %v85
  %94 = vst [vmem:[%s7 + $0x30] sm:$0xff] %v86
  %95 = vst [vmem:[%s7 + $0x38] sm:$0xff] %v87
  %v96 = vld [vmem:[%s3] sm:$0xff]
  %v97 = vld [vmem:[%s3 + $0x8] sm:$0xff]
  %v98 = vld [vmem:[%s3 + $0x10] sm:$0xff]
  %v99 = vld [vmem:[%s3 + $0x18] sm:$0xff]
  %v100 = vld [vmem:[%s3 + $0x20] sm:$0xff]
  %v101 = vld [vmem:[%s3 + $0x28] sm:$0xff]
  %v102 = vld [vmem:[%s3 + $0x30] sm:$0xff]
  %v103 = vld [vmem:[%s3 + $0x38] sm:$0xff]
  %v104 = vld [vmem:[%s3 + $0x40] sm:$0xff]
  %v105 = vld [vmem:[%s3 + $0x48] sm:$0xff]
  %v106 = vld [vmem:[%s3 + $0x50] sm:$0xff]
  %v107 = vld [vmem:[%s3 + $0x58] sm:$0xff]
  %v108 = vld [vmem:[%s3 + $0x60] sm:$0xff]
  %v109 = vld [vmem:[%s3 + $0x68] sm:$0xff]
  %v110 = vld [vmem:[%s3 + $0x70] sm:$0xff]
  %v111 = vld [vmem:[%s3 + $0x78] sm:$0xff]
  %v112 = vld [vmem:[%s3 + $0x80] sm:$0xff]
  %v113 = vld [vmem:[%s3 + $0x88] sm:$0xff]
  %v114 = vld [vmem:[%s3 + $0x90] sm:$0xff]
  %v115 = vld [vmem:[%s3 + $0x98] sm:$0xff]
  %v116 = vld [vmem:[%s3 + $0xa0] sm:$0xff]
  %v117 = vld [vmem:[%s3 + $0xa8] sm:$0xff]
  %v118 = vld [vmem:[%s3 + $0xb0] sm:$0xff]
  %v119 = vld [vmem:[%s3 + $0xb8] sm:$0xff]
  %v120 = vld [vmem:[%s3 + $0xc0] sm:$0xff]
  %v121 = vld [vmem:[%s3 + $0xc8] sm:$0xff]
  %v122 = vld [vmem:[%s3 + $0xd0] sm:$0xff]
  %v123 = vld [vmem:[%s3 + $0xd8] sm:$0xff]
  %v124 = vld [vmem:[%s3 + $0xe0] sm:$0xff]
  %v125 = vld [vmem:[%s3 + $0xe8] sm:$0xff]
  %v126 = vld [vmem:[%s3 + $0xf0] sm:$0xff]
  %v127 = vld [vmem:[%s3 + $0xf8] sm:$0xff]
  %128 = vmatprep.subr.mxu0 0.0
  %129 = vmatpush1.msra.mxu0 %v96
  %130 = vmatprep.subr.mxu0 0.0
  %131 = vmatpush1.msra.mxu0 %v97
  %132 = vmatprep.subr.mxu0 0.0
  %133 = vmatpush1.msra.mxu0 %v98
  %134 = vmatprep.subr.mxu0 0.0
  %135 = vmatpush1.msra.mxu0 %v99
  %136 = vmatprep.subr.mxu0 0.0
  %137 = vmatpush1.msra.mxu0 %v100
  %138 = vmatprep.subr.mxu0 0.0
  %139 = vmatpush1.msra.mxu0 %v101
  %140 = vmatprep.subr.mxu0 0.0
  %141 = vmatpush1.msra.mxu0 %v102
  %142 = vmatprep.subr.mxu0 0.0
  %143 = vmatpush1.msra.mxu0 %v103
  %144 = vmatprep.subr.mxu0 0.0
  %145 = vmatpush1.msra.mxu0 %v104
  %146 = vmatprep.subr.mxu0 0.0
  %147 = vmatpush1.msra.mxu0 %v105
  %148 = vmatprep.subr.mxu0 0.0
  %149 = vmatpush1.msra.mxu0 %v106
  %150 = vmatprep.subr.mxu0 0.0
  %151 = vmatpush1.msra.mxu0 %v107
  %152 = vmatprep.subr.mxu0 0.0
  %153 = vmatpush1.msra.mxu0 %v108
  %154 = vmatprep.subr.mxu0 0.0
  %155 = vmatpush1.msra.mxu0 %v109
  %156 = vmatprep.subr.mxu0 0.0
  %157 = vmatpush1.msra.mxu0 %v110
  %158 = vmatprep.subr.mxu0 0.0
  %159 = vmatpush1.msra.mxu0 %v111
  %160 = vmatprep.subr.mxu0 0.0
  %161 = vmatpush1.msra.mxu0 %v112
  %162 = vmatprep.subr.mxu0 0.0
  %163 = vmatpush1.msra.mxu0 %v113
  %164 = vmatprep.subr.mxu0 0.0
  %165 = vmatpush1.msra.mxu0 %v114
  %166 = vmatprep.subr.mxu0 0.0
  %167 = vmatpush1.msra.mxu0 %v115
  %168 = vmatprep.subr.mxu0 0.0
  %169 = vmatpush1.msra.mxu0 %v116
  %170 = vmatprep.subr.mxu0 0.0
  %171 = vmatpush1.msra.mxu0 %v117
  %172 = vmatprep.subr.mxu0 0.0
  %173 = vmatpush1.msra.mxu0 %v118
  %174 = vmatprep.subr.mxu0 0.0
  %175 = vmatpush1.msra.mxu0 %v119
  %176 = vmatprep.subr.mxu0 0.0
  %177 = vmatpush1.msra.mxu0 %v120
  %178 = vmatprep.subr.mxu0 0.0
  %179 = vmatpush1.msra.mxu0 %v121
  %180 = vmatprep.subr.mxu0 0.0
  %181 = vmatpush1.msra.mxu0 %v122
  %182 = vmatprep.subr.mxu0 0.0
  %183 = vmatpush1.msra.mxu0 %v123
  %184 = vmatprep.subr.mxu0 0.0
  %185 = vmatpush1.msra.mxu0 %v124
  %186 = vmatprep.subr.mxu0 0.0
  %187 = vmatpush1.msra.mxu0 %v125
  %188 = vmatprep.subr.mxu0 0.0
  %189 = vmatpush1.msra.mxu0 %v126
  %190 = vmatprep.subr.mxu0 0.0
  %191 = vmatpush1.msra.mxu0 %v127
  %192 = vmatprep.mubr.f32.mxu0 %v81
  %193 = vmatmul.mubr.f32.gmra.mrb[0].mxu0 %v80
  %v194 = vpop.f32.mrb[0].mxu0
  %v195 = vadd.f32 0.0, %v194
  %v196 = vpop.f32.mrb[0].mxu0
  %197 = vmatprep.mubr.f32.mxu0 %v83
  %198 = vmatmul.mubr.f32.gmra.mrb[0].mxu0 %v82
  %v199 = vpop.f32.mrb[0].mxu0
  %v200 = vadd.f32 0.0, %v199
  %v201 = vpop.f32.mrb[0].mxu0
  %202 = vmatprep.mubr.f32.mxu0 %v85
  %203 = vmatmul.mubr.f32.gmra.mrb[0].mxu0 %v84
  %v204 = vpop.f32.mrb[0].mxu0
  %v205 = vadd.f32 0.0, %v204
  %v206 = vpop.f32.mrb[0].mxu0
  %207 = vmatprep.mubr.f32.mxu0 %v87
  %208 = vmatmul.mubr.f32.gmra.mrb[0].mxu0 %v86
  %v209 = vpop.f32.mrb[0].mxu0
  %v210 = vadd.f32 0.0, %v209
  %v211 = vpop.f32.mrb[0].mxu0
  %212 = vdwg.mxu0
  %v213 = vld [vmem:[%s4] sm:$0xff]
  %v214 = vld [vmem:[%s4 + $0x8] sm:$0xff]
  %v215 = vld [vmem:[%s4 + $0x10] sm:$0xff]
  %v216 = vld [vmem:[%s4 + $0x18] sm:$0xff]
  %v217 = vld [vmem:[%s4 + $0x20] sm:$0xff]
  %v218 = vld [vmem:[%s4 + $0x28] sm:$0xff]
  %v219 = vld [vmem:[%s4 + $0x30] sm:$0xff]
  %v220 = vld [vmem:[%s4 + $0x38] sm:$0xff]
  %v221 = vld [vmem:[%s4 + $0x40] sm:$0xff]
  %v222 = vld [vmem:[%s4 + $0x48] sm:$0xff]
  %v223 = vld [vmem:[%s4 + $0x50] sm:$0xff]
  %v224 = vld [vmem:[%s4 + $0x58] sm:$0xff]
  %v225 = vld [vmem:[%s4 + $0x60] sm:$0xff]
  %v226 = vld [vmem:[%s4 + $0x68] sm:$0xff]
  %v227 = vld [vmem:[%s4 + $0x70] sm:$0xff]
  %v228 = vld [vmem:[%s4 + $0x78] sm:$0xff]
  %v229 = vld [vmem:[%s4 + $0x80] sm:$0xff]
  %v230 = vld [vmem:[%s4 + $0x88] sm:$0xff]
  %v231 = vld [vmem:[%s4 + $0x90] sm:$0xff]
  %v232 = vld [vmem:[%s4 + $0x98] sm:$0xff]
  %v233 = vld [vmem:[%s4 + $0xa0] sm:$0xff]
  %v234 = vld [vmem:[%s4 + $0xa8] sm:$0xff]
  %v235 = vld [vmem:[%s4 + $0xb0] sm:$0xff]
  %v236 = vld [vmem:[%s4 + $0xb8] sm:$0xff]
  %v237 = vld [vmem:[%s4 + $0xc0] sm:$0xff]
  %v238 = vld [vmem:[%s4 + $0xc8] sm:$0xff]
  %v239 = vld [vmem:[%s4 + $0xd0] sm:$0xff]
  %v240 = vld [vmem:[%s4 + $0xd8] sm:$0xff]
  %v241 = vld [vmem:[%s4 + $0xe0] sm:$0xff]
  %v242 = vld [vmem:[%s4 + $0xe8] sm:$0xff]
  %v243 = vld [vmem:[%s4 + $0xf0] sm:$0xff]
  %v244 = vld [vmem:[%s4 + $0xf8] sm:$0xff]
  %245 = vmatprep.subr.mxu0 0.0
  %246 = vmatpush1.msra.mxu0 %v213
  %247 = vmatprep.subr.mxu0 0.0
  %248 = vmatpush1.msra.mxu0 %v214
  %249 = vmatprep.subr.mxu0 0.0
  %250 = vmatpush1.msra.mxu0 %v215
  %251 = vmatprep.subr.mxu0 0.0
  %252 = vmatpush1.msra.mxu0 %v216
  %253 = vmatprep.subr.mxu0 0.0
  %254 = vmatpush1.msra.mxu0 %v217
  %255 = vmatprep.subr.mxu0 0.0
  %256 = vmatpush1.msra.mxu0 %v218
  %257 = vmatprep.subr.mxu0 0.0
  %258 = vmatpush1.msra.mxu0 %v219
  %259 = vmatprep.subr.mxu0 0.0
  %260 = vmatpush1.msra.mxu0 %v220
  %261 = vmatprep.subr.mxu0 0.0
  %262 = vmatpush1.msra.mxu0 %v221
  %263 = vmatprep.subr.mxu0 0.0
  %264 = vmatpush1.msra.mxu0 %v222
  %265 = vmatprep.subr.mxu0 0.0
  %266 = vmatpush1.msra.mxu0 %v223
  %267 = vmatprep.subr.mxu0 0.0
  %268 = vmatpush1.msra.mxu0 %v224
  %269 = vmatprep.subr.mxu0 0.0
  %270 = vmatpush1.msra.mxu0 %v225
  %271 = vmatprep.subr.mxu0 0.0
  %272 = vmatpush1.msra.mxu0 %v226
  %273 = vmatprep.subr.mxu0 0.0
  %274 = vmatpush1.msra.mxu0 %v227
  %275 = vmatprep.subr.mxu0 0.0
  %276 = vmatpush1.msra.mxu0 %v228
  %277 = vmatprep.subr.mxu0 0.0
  %278 = vmatpush1.msra.mxu0 %v229
  %279 = vmatprep.subr.mxu0 0.0
  %280 = vmatpush1.msra.mxu0 %v230
  %281 = vmatprep.subr.mxu0 0.0
  %282 = vmatpush1.msra.mxu0 %v231
  %283 = vmatprep.subr.mxu0 0.0
  %284 = vmatpush1.msra.mxu0 %v232
  %285 = vmatprep.subr.mxu0 0.0
  %286 = vmatpush1.msra.mxu0 %v233
  %287 = vmatprep.subr.mxu0 0.0
  %288 = vmatpush1.msra.mxu0 %v234
  %289 = vmatprep.subr.mxu0 0.0
  %290 = vmatpush1.msra.mxu0 %v235
  %291 = vmatprep.subr.mxu0 0.0
  %292 = vmatpush1.msra.mxu0 %v236
  %293 = vmatprep.subr.mxu0 0.0
  %294 = vmatpush1.msra.mxu0 %v237
  %295 = vmatprep.subr.mxu0 0.0
  %296 = vmatpush1.msra.mxu0 %v238
  %297 = vmatprep.subr.mxu0 0.0
  %298 = vmatpush1.msra.mxu0 %v239
  %299 = vmatprep.subr.mxu0 0.0
  %300 = vmatpush1.msra.mxu0 %v240
  %301 = vmatprep.subr.mxu0 0.0
  %302 = vmatpush1.msra.mxu0 %v241
  %303 = vmatprep.subr.mxu0 0.0
  %304 = vmatpush1.msra.mxu0 %v242
  %305 = vmatprep.subr.mxu0 0.0
  %306 = vmatpush1.msra.mxu0 %v243
  %307 = vmatprep.subr.mxu0 0.0
  %308 = vmatpush1.msra.mxu0 %v244
  %309 = vmatprep.mubr.f32.mxu0 %v81
  %310 = vmatmul.mubr.f32.gmra.mrb[0].mxu0 %v80
  %v311 = vpop.f32.mrb[0].mxu0
  %v312 = vadd.f32 0.0, %v311
  %v313 = vpop.f32.mrb[0].mxu0
  %314 = vmatprep.mubr.f32.mxu0 %v83
  %315 = vmatmul.mubr.f32.gmra.mrb[0].mxu0 %v82
  %v316 = vpop.f32.mrb[0].mxu0
  %v317 = vadd.f32 0.0, %v316
  %v318 = vpop.f32.mrb[0].mxu0
  %319 = vmatprep.mubr.f32.mxu0 %v85
  %320 = vmatmul.mubr.f32.gmra.mrb[0].mxu0 %v84
  %v321 = vpop.f32.mrb[0].mxu0
  %v322 = vadd.f32 0.0, %v321
  %v323 = vpop.f32.mrb[0].mxu0
  %324 = vmatprep.mubr.f32.mxu0 %v87
  %325 = vmatmul.mubr.f32.gmra.mrb[0].mxu0 %v86
  %v326 = vpop.f32.mrb[0].mxu0
  %v327 = vadd.f32 0.0, %v326
  %v328 = vpop.f32.mrb[0].mxu0
  %329 = vdwg.mxu0
  %v330 = vmax.f32 %v195, %v312
  %v331 = vmax.f32 %v200, %v317
  %v332 = vmax.f32 %v205, %v322
  %v333 = vmax.f32 %v210, %v327
  %v334 = vld [vmem:[%s5] sm:$0xff]
  %v335 = vld [vmem:[%s5 + $0x8] sm:$0xff]
  %vm336 = vcmask 261120
  %v338 = vsel %vm336, %v334, 0
  %v341 = vsel %vm336, %v335, 0
  %343 = vmatprep.subr.mxu0 0.0
  %344 = vmatpush1.msra.mxu0 %v330
  %345 = vmatprep.subr.mxu0 0.0
  %346 = vmatpush1.msra.mxu0 %v331
  %347 = vmatprep.subr.mxu0 0.0
  %348 = vmatpush1.msra.mxu0 %v332
  %349 = vmatprep.subr.mxu0 0.0
  %350 = vmatpush1.msra.mxu0 %v333
  %351 = vmatprep.subr.mxu0 0.0
  %352 = vmatpush1.msra.mxu0 0.0
  %353 = vmatprep.subr.mxu0 0.0
  %354 = vmatpush1.msra.mxu0 0.0
  %355 = vmatprep.subr.mxu0 0.0
  %356 = vmatpush1.msra.mxu0 0.0
  %357 = vmatprep.subr.mxu0 0.0
  %358 = vmatpush1.msra.mxu0 0.0
  %359 = vmatprep.subr.mxu0 0.0
  %360 = vmatpush1.msra.mxu0 0.0
  %361 = vmatprep.subr.mxu0 0.0
  %362 = vmatpush1.msra.mxu0 0.0
  %363 = vmatprep.subr.mxu0 0.0
  %364 = vmatpush1.msra.mxu0 0.0
  %365 = vmatprep.subr.mxu0 0.0
  %366 = vmatpush1.msra.mxu0 0.0
  %367 = vmatprep.subr.mxu0 0.0
  %368 = vmatpush1.msra.mxu0 0.0
  %369 = vmatprep.subr.mxu0 0.0
  %370 = vmatpush1.msra.mxu0 0.0
  %371 = vmatprep.subr.mxu0 0.0
  %372 = vmatpush1.msra.mxu0 0.0
  %373 = vmatprep.subr.mxu0 0.0
  %374 = vmatpush1.msra.mxu0 0.0
  %375 = vmatprep.subr.mxu0 0.0
  %376 = vmatpush1.msra.mxu0 0.0
  %377 = vmatprep.subr.mxu0 0.0
  %378 = vmatpush1.msra.mxu0 0.0
  %379 = vmatprep.subr.mxu0 0.0
  %380 = vmatpush1.msra.mxu0 0.0
  %381 = vmatprep.subr.mxu0 0.0
  %382 = vmatpush1.msra.mxu0 0.0
  %383 = vmatprep.subr.mxu0 0.0
  %384 = vmatpush1.msra.mxu0 0.0
  %385 = vmatprep.subr.mxu0 0.0
  %386 = vmatpush1.msra.mxu0 0.0
  %387 = vmatprep.subr.mxu0 0.0
  %388 = vmatpush1.msra.mxu0 0.0
  %389 = vmatprep.subr.mxu0 0.0
  %390 = vmatpush1.msra.mxu0 0.0
  %391 = vmatprep.subr.mxu0 0.0
  %392 = vmatpush1.msra.mxu0 0.0
  %393 = vmatprep.subr.mxu0 0.0
  %394 = vmatpush1.msra.mxu0 0.0
  %395 = vmatprep.subr.mxu0 0.0
  %396 = vmatpush1.msra.mxu0 0.0
  %397 = vmatprep.subr.mxu0 0.0
  %398 = vmatpush1.msra.mxu0 0.0
  %399 = vmatprep.subr.mxu0 0.0
  %400 = vmatpush1.msra.mxu0 0.0
  %401 = vmatprep.subr.mxu0 0.0
  %402 = vmatpush1.msra.mxu0 0.0
  %403 = vmatprep.subr.mxu0 0.0
  %404 = vmatpush1.msra.mxu0 0.0
  %405 = vmatprep.subr.mxu0 0.0
  %406 = vmatpush1.msra.mxu0 0.0
  %407 = vmatprep.mubr.f32.mxu0 0.0
  %408 = vmatmul.mubr.f32.gmra.mrb[0].mxu0 %v338
  %v409 = vpop.f32.mrb[0].mxu0
  %v410 = vadd.f32 0.0, %v409
  %v411 = vpop.f32.mrb[0].mxu0
  %412 = vmatprep.mubr.f32.mxu0 0.0
  %413 = vmatmul.mubr.f32.gmra.mrb[0].mxu0 %v341
  %v414 = vpop.f32.mrb[0].mxu0
  %v415 = vadd.f32 0.0, %v414
  %v416 = vpop.f32.mrb[0].mxu0
  %417 = vdwg.mxu0
  %v418 = vld [vmem:[%s6] sm:$0xff]
  %v419 = vld [vmem:[%s6 + $0x8] sm:$0xff]
  %v421 = vsel %vm336, %v418, 0
  %v424 = vsel %vm336, %v419, 0
  %426 = vmatprep.subr.mxu0 0.0
  %427 = vmatpush1.msra.mxu0 %v330
  %428 = vmatprep.subr.mxu0 0.0
  %429 = vmatpush1.msra.mxu0 %v331
  %430 = vmatprep.subr.mxu0 0.0
  %431 = vmatpush1.msra.mxu0 %v332
  %432 = vmatprep.subr.mxu0 0.0
  %433 = vmatpush1.msra.mxu0 %v333
  %434 = vmatprep.subr.mxu0 0.0
  %435 = vmatpush1.msra.mxu0 0.0
  %436 = vmatprep.subr.mxu0 0.0
  %437 = vmatpush1.msra.mxu0 0.0
  %438 = vmatprep.subr.mxu0 0.0
  %439 = vmatpush1.msra.mxu0 0.0
  %440 = vmatprep.subr.mxu0 0.0
  %441 = vmatpush1.msra.mxu0 0.0
  %442 = vmatprep.subr.mxu0 0.0
  %443 = vmatpush1.msra.mxu0 0.0
  %444 = vmatprep.subr.mxu0 0.0
  %445 = vmatpush1.msra.mxu0 0.0
  %446 = vmatprep.subr.mxu0 0.0
  %447 = vmatpush1.msra.mxu0 0.0
  %448 = vmatprep.subr.mxu0 0.0
  %449 = vmatpush1.msra.mxu0 0.0
  %450 = vmatprep.subr.mxu0 0.0
  %451 = vmatpush1.msra.mxu0 0.0
  %452 = vmatprep.subr.mxu0 0.0
  %453 = vmatpush1.msra.mxu0 0.0
  %454 = vmatprep.subr.mxu0 0.0
  %455 = vmatpush1.msra.mxu0 0.0
  %456 = vmatprep.subr.mxu0 0.0
  %457 = vmatpush1.msra.mxu0 0.0
  %458 = vmatprep.subr.mxu0 0.0
  %459 = vmatpush1.msra.mxu0 0.0
  %460 = vmatprep.subr.mxu0 0.0
  %461 = vmatpush1.msra.mxu0 0.0
  %462 = vmatprep.subr.mxu0 0.0
  %463 = vmatpush1.msra.mxu0 0.0
  %464 = vmatprep.subr.mxu0 0.0
  %465 = vmatpush1.msra.mxu0 0.0
  %466 = vmatprep.subr.mxu0 0.0
  %467 = vmatpush1.msra.mxu0 0.0
  %468 = vmatprep.subr.mxu0 0.0
  %469 = vmatpush1.msra.mxu0 0.0
  %470 = vmatprep.subr.mxu0 0.0
  %471 = vmatpush1.msra.mxu0 0.0
  %472 = vmatprep.subr.mxu0 0.0
  %473 = vmatpush1.msra.mxu0 0.0
  %474 = vmatprep.subr.mxu0 0.0
  %475 = vmatpush1.msra.mxu0 0.0
  %476 = vmatprep.subr.mxu0 0.0
  %477 = vmatpush1.msra.mxu0 0.0
  %478 = vmatprep.subr.mxu0 0.0
  %479 = vmatpush1.msra.mxu0 0.0
  %480 = vmatprep.subr.mxu0 0.0
  %481 = vmatpush1.msra.mxu0 0.0
  %482 = vmatprep.subr.mxu0 0.0
  %483 = vmatpush1.msra.mxu0 0.0
  %484 = vmatprep.subr.mxu0 0.0
  %485 = vmatpush1.msra.mxu0 0.0
  %486 = vmatprep.subr.mxu0 0.0
  %487 = vmatpush1.msra.mxu0 0.0
  %488 = vmatprep.subr.mxu0 0.0
  %489 = vmatpush1.msra.mxu0 0.0
  %490 = vmatprep.mubr.f32.mxu0 0.0
  %491 = vmatmul.mubr.f32.gmra.mrb[0].mxu0 %v421
  %v492 = vpop.f32.mrb[0].mxu0
  %v493 = vadd.f32 0.0, %v492
  %v494 = vpop.f32.mrb[0].mxu0
  %495 = vmatprep.mubr.f32.mxu0 0.0
  %496 = vmatmul.mubr.f32.gmra.mrb[0].mxu0 %v424
  %v497 = vpop.f32.mrb[0].mxu0
  %v498 = vadd.f32 0.0, %v497
  %v499 = vpop.f32.mrb[0].mxu0
  %500 = vdwg.mxu0
  %v501 = vmax.f32 %v410, %v493
  %v502 = vmax.f32 %v415, %v498
  %503 = vst [vmem:[%s8] sm:$0xff] %v501
  %504 = vst [vmem:[%s8 + $0x8] sm:$0xff] %v502
  // Predicated region
  $region30: #{reduction_block_forward.5} parent=0 // pred_check
    _
  $region31: #{reduction_block_forward.5} parent=0 // pred_check_branch
    %506 = sbr.rel (0) target = $region33
  $region32: #{reduction_block_forward.5} parent=0 // pred_region
    _
  $region33: #{reduction_block_forward.5} parent=0 // pred_fallthru
    _
  // Predicated region
  $region34: #{reduction_block_forward.5} parent=0 // pred_check
    _
  $region35: #{reduction_block_forward.5} parent=0 // pred_check_branch
    %508 = sbr.rel (0) target = $region37
  $region36: #{reduction_block_forward.5} parent=0 // pred_region
    _
  $region37: #{reduction_block_forward.5} parent=0 // pred_fallthru
    _
  // Predicated region
  $region38: #{reduction_block_forward.5} parent=0 // pred_check
    _
  $region39: #{reduction_block_forward.5} parent=0 // pred_check_branch
    %510 = sbr.rel (0) target = $region41
  $region40: #{reduction_block_forward.5} parent=0 // pred_region
    _
  $region41: #{reduction_block_forward.5} parent=0 // pred_fallthru
    _
  // Predicated region
  $region42: #{reduction_block_forward.5} parent=0 // pred_check
    _
  $region43: #{reduction_block_forward.5} parent=0 // pred_check_branch
    %512 = sbr.rel (0) target = $region45
  $region44: #{reduction_block_forward.5} parent=0 // pred_region
    _
  $region45: #{reduction_block_forward.5} parent=0 // pred_fallthru
    _

</llo_original>
